<compile_context>
chip_gen: v5e
topology: v5e:2x2
jax: 0.10.0
libtpu: 0.0.40
codegen_flags: <defaults>
</compile_context>

<pallas_src>
import functools

import jax
import jax.numpy as jnp
from jax.experimental import pallas as pl
from jax.experimental.pallas import tpu as pltpu


# ----------------------------------------------------------------------------
# Pallas kernel
# ----------------------------------------------------------------------------
def _make_lstm_kernel(seq_len, seq_pad, chunk, num_layers, hidden_size):
    H = hidden_size
    L = num_layers
    TS = chunk
    n_chunks = seq_pad // TS

    def kernel(*refs):
        # Unpack refs:
        #   tok (SMEM), tab0 (C,4H), whh0 (H,4H),
        #   [wih_l]*(L-1) (H,4H), [whh_l]*(L-1) (H,4H), [b_l]*(L-1) (1,4H),
        #   wdec (H,Cpad), bdec (1,Cpad),
        #   out (S_pad,Cpad), h_n (L,H), c_n (L,H), hchunk scratch (TS,H)
        idx = 0
        tok_ref = refs[idx]; idx += 1
        tab0_ref = refs[idx]; idx += 1
        whh0_ref = refs[idx]; idx += 1
        wih_refs = refs[idx:idx + (L - 1)]; idx += (L - 1)
        whh_refs = refs[idx:idx + (L - 1)]; idx += (L - 1)
        b_refs = refs[idx:idx + (L - 1)]; idx += (L - 1)
        wdec_ref = refs[idx]; idx += 1
        bdec_ref = refs[idx]; idx += 1
        out_ref = refs[idx]; idx += 1
        hn_ref = refs[idx]; idx += 1
        cn_ref = refs[idx]; idx += 1
        hchunk_ref = refs[idx]; idx += 1

        def lstm_cell(gates, c_prev):
            # Single full-4H sigmoid EUP push.  g-gate pre-activations were
            # pre-scaled by 2 in the wrapper, so 2*sigmoid(2z)-1 == tanh(z).
            sig = jax.nn.sigmoid(gates)                 # (1, 4H)
            i = sig[:, 0 * H:1 * H]
            f = sig[:, 1 * H:2 * H]
            g = 2.0 * sig[:, 2 * H:3 * H] - 1.0
            o = sig[:, 3 * H:4 * H]
            c_new = f * c_prev + i * g
            h_new = o * jnp.tanh(c_new)
            return h_new, c_new

        def step(ti, carry, ci):
            hs, cs = carry                              # tuples of (1,H)
            t = ci * TS + ti
            tok = tok_ref[t]                            # scalar id (SMEM)

            # --- Off the critical chain: hh contributions for ALL layers ---
            # They depend only on h[t-1]; the scheduler overlaps them with the
            # serial layer wavefront below.  Layer>=1 biases folded in here.
            hh = [jnp.dot(hs[0], whh0_ref[...],
                          preferred_element_type=jnp.float32)]
            for l in range(1, L):
                hh.append(
                    jnp.dot(hs[l], whh_refs[l - 1][...],
                            preferred_element_type=jnp.float32)
                    + b_refs[l - 1][...])

            # --- Serial chain ---
            # Layer 0: one-hot(x) @ W_ih == row gather (bias pre-folded).
            gates0 = tab0_ref[pl.ds(tok, 1), :] + hh[0]            # (1, 4H)
            h_l, c_l = lstm_cell(gates0, cs[0])
            new_hs = [h_l]
            new_cs = [c_l]
            layer_in = h_l

            for l in range(1, L):                       # static python loop
                gates = (jnp.dot(layer_in, wih_refs[l - 1][...],
                                 preferred_element_type=jnp.float32)
                         + hh[l])
                h_l, c_l = lstm_cell(gates, cs[l])
                new_hs.append(h_l)
                new_cs.append(c_l)
                layer_in = h_l

            if seq_pad != seq_len:
                # Padded timesteps (t >= seq_len) must not corrupt the carry.
                valid = t < seq_len
                new_hs = [jnp.where(valid, n, o) for n, o in zip(new_hs, hs)]
                new_cs = [jnp.where(valid, n, o) for n, o in zip(new_cs, cs)]

            # Stash last layer's hidden state for this chunk's decoder.
            hchunk_ref[pl.ds(ti, 1), :] = layer_in
            return (tuple(new_hs), tuple(new_cs))

        def chunk_body(ci, carry):
            carry = jax.lax.fori_loop(
                0, TS, lambda ti, c: step(ti, c, ci), carry, unroll=True)
            # Decoder for this chunk: one (TS,H)@(H,Cpad) matmul + lane-dense
            # store; free filler overlapping the next chunk's recurrence.
            row0 = ci * TS
            if not isinstance(row0, int):
                row0 = pl.multiple_of(row0, TS)
            out_ref[pl.ds(row0, TS), :] = (
                jnp.dot(hchunk_ref[...], wdec_ref[...],
                        preferred_element_type=jnp.float32)
                + bdec_ref[...])
            return carry

        h_init = tuple(jnp.zeros((1, H), jnp.float32) for _ in range(L))
        c_init = tuple(jnp.zeros((1, H), jnp.float32) for _ in range(L))

        if n_chunks == 1:
            hs, cs = chunk_body(0, (h_init, c_init))
        else:
            hs, cs = jax.lax.fori_loop(0, n_chunks, chunk_body,
                                       (h_init, c_init), unroll=False)

        hn_ref[...] = jnp.concatenate(list(hs), axis=0)
        cn_ref[...] = jnp.concatenate(list(cs), axis=0)

    return kernel


# ----------------------------------------------------------------------------
# Wrapper
# ----------------------------------------------------------------------------
@functools.partial(jax.jit, static_argnames=("char_size", "hidden_size",
                                             "num_layers"))
def torch_lstm_forward(input_seq, params, *, char_size, hidden_size,
                       num_layers):
    """Returns (logits (S, C), h_n (L, H), c_n (L, H))."""
    S = input_seq.shape[0]
    H = hidden_size
    C = char_size
    C_pad = ((C + 127) // 128) * 128                 # lane-dense decoder out

    # Chunking: full unroll only for small chunks; longer sequences are
    # processed in 32-step chunks with an interleaved decoder.
    TS = S if S <= 32 else 32
    S_pad = ((S + TS - 1) // TS) * TS
    n_chunks = S_pad // TS

    # Clamp token ids: the in-kernel VMEM gather has no bounds check.
    tok = jnp.clip(input_seq.astype(jnp.int32), 0, C - 1)
    if S_pad != S:
        tok = jnp.concatenate(
            [tok, jnp.zeros((S_pad - S,), jnp.int32)], axis=0)

    def gscale(w_t):
        # Pre-scale g-gate columns by 2 so tanh(z) == 2*sigmoid(2z)-1 in-kernel.
        return w_t.at[:, 2 * H:3 * H].multiply(2.0)

    # Layer 0: gather table = W_ih.T with combined bias folded into every row.
    b0 = params["b_ih_l0"] + params["b_hh_l0"]
    tab0 = gscale(params["w_ih_l0"].T.astype(jnp.float32) + b0[None, :])
    whh0 = gscale(params["w_hh_l0"].T.astype(jnp.float32))

    kernel_inputs = [tok, tab0, whh0]
    for l in range(1, num_layers):
        kernel_inputs.append(gscale(params[f"w_ih_l{l}"].T.astype(jnp.float32)))
    for l in range(1, num_layers):
        kernel_inputs.append(gscale(params[f"w_hh_l{l}"].T.astype(jnp.float32)))
    for l in range(1, num_layers):
        b = (params[f"b_ih_l{l}"] + params[f"b_hh_l{l}"]).astype(jnp.float32)
        b = b.at[2 * H:3 * H].multiply(2.0)
        kernel_inputs.append(b.reshape(1, 4 * H))
    # Decoder weights zero-padded to a 128-lane-aligned output width.
    wdec = jnp.zeros((H, C_pad), jnp.float32).at[:, :C].set(params["w_dec"].T)
    bdec = jnp.zeros((1, C_pad), jnp.float32).at[:, :C].set(
        params["b_dec"][None, :])
    kernel_inputs.append(wdec)
    kernel_inputs.append(bdec)

    smem_spec = pl.BlockSpec(memory_space=pltpu.MemorySpace.SMEM)
    vmem_spec = pl.BlockSpec(memory_space=pltpu.MemorySpace.VMEM)
    in_specs = [smem_spec] + [vmem_spec] * (len(kernel_inputs) - 1)

    out_shapes = (
        jax.ShapeDtypeStruct((S_pad, C_pad), jnp.float32),       # padded logits
        jax.ShapeDtypeStruct((num_layers, H), jnp.float32),      # h_n
        jax.ShapeDtypeStruct((num_layers, H), jnp.float32),      # c_n
    )

    kernel = _make_lstm_kernel(S, S_pad, TS, num_layers, H)

    logits_pad, h_n, c_n = pl.pallas_call(
        kernel,
        out_shape=out_shapes,
        in_specs=in_specs,
        out_specs=(vmem_spec, vmem_spec, vmem_spec),
        scratch_shapes=[
            pltpu.VMEM((TS, H), jnp.float32),    # last-layer h for one chunk
        ],
        compiler_params=pltpu.CompilerParams(
            vmem_limit_bytes=64 * 1024 * 1024),
    )(*kernel_inputs)

    return logits_pad[:S, :C], h_n, c_n


# ----------------------------------------------------------------------------
# Deterministic parameter init (PyTorch-style uniform(-1/sqrt(H), 1/sqrt(H)))
# ----------------------------------------------------------------------------
def init_params(key, char_size, hidden_size, num_layers):
    H = hidden_size
    C = char_size
    k = 1.0 / jnp.sqrt(jnp.float32(H))
    params = {}
    for l in range(num_layers):
        in_dim = C if l == 0 else H
        key, k1, k2, k3, k4 = jax.random.split(key, 5)
        params[f"w_ih_l{l}"] = jax.random.uniform(k1, (4 * H, in_dim),
                                                  jnp.float32, -k, k)
        params[f"w_hh_l{l}"] = jax.random.uniform(k2, (4 * H, H),
                                                  jnp.float32, -k, k)
        params[f"b_ih_l{l}"] = jax.random.uniform(k3, (4 * H,),
                                                  jnp.float32, -k, k)
        params[f"b_hh_l{l}"] = jax.random.uniform(k4, (4 * H,),
                                                  jnp.float32, -k, k)
    key, k1, k2 = jax.random.split(key, 3)
    kd = 1.0 / jnp.sqrt(jnp.float32(H))
    params["w_dec"] = jax.random.uniform(k1, (C, H), jnp.float32, -kd, kd)
    params["b_dec"] = jax.random.uniform(k2, (C,), jnp.float32, -kd, kd)
    return params


# ----------------------------------------------------------------------------
# Pure-JAX reference (mirrors nn.LSTM math exactly) for validation
# ----------------------------------------------------------------------------
def reference_forward(input_seq, params, char_size, hidden_size, num_layers):
    H = hidden_size
    x = jax.nn.one_hot(input_seq, char_size, dtype=jnp.float32)
    S = x.shape[0]
    h = [jnp.zeros((H,), jnp.float32) for _ in range(num_layers)]
    c = [jnp.zeros((H,), jnp.float32) for _ in range(num_layers)]
    outs = []
    for t in range(S):
        layer_in = x[t]
        for l in range(num_layers):
            gates = (params[f"w_ih_l{l}"] @ layer_in + params[f"b_ih_l{l}"]
                     + params[f"w_hh_l{l}"] @ h[l] + params[f"b_hh_l{l}"])
            i = jax.nn.sigmoid(gates[0 * H:1 * H])
            f = jax.nn.sigmoid(gates[1 * H:2 * H])
            g = jnp.tanh(gates[2 * H:3 * H])
            o = jax.nn.sigmoid(gates[3 * H:4 * H])
            c[l] = f * c[l] + i * g
            h[l] = o * jnp.tanh(c[l])
            layer_in = h[l]
        outs.append(params["w_dec"] @ layer_in + params["b_dec"])
    return (jnp.stack(outs, axis=0),
            jnp.stack(h, axis=0),
            jnp.stack(c, axis=0))


# ----------------------------------------------------------------------------
if __name__ == "__main__":
    CHAR_SIZE = 20
    HIDDEN_SIZE = 32
    NUM_LAYERS = 2
    SEQ_LEN = 8

    key = jax.random.PRNGKey(0)
    key, pkey, ikey = jax.random.split(key, 3)

    params = init_params(pkey, CHAR_SIZE, HIDDEN_SIZE, NUM_LAYERS)
    input_seq = jax.random.randint(ikey, (SEQ_LEN,), 0, CHAR_SIZE,
                                   dtype=jnp.int32)

    logits, h_n, c_n = torch_lstm_forward(
        input_seq, params,
        char_size=CHAR_SIZE, hidden_size=HIDDEN_SIZE, num_layers=NUM_LAYERS)
    jax.block_until_ready((logits, h_n, c_n))

    ref_logits, ref_h, ref_c = reference_forward(
        input_seq, params, CHAR_SIZE, HIDDEN_SIZE, NUM_LAYERS)

    assert logits.shape == (SEQ_LEN, CHAR_SIZE)
    assert jnp.allclose(logits, ref_logits, atol=1e-4, rtol=1e-4)
    assert jnp.allclose(h_n, ref_h, atol=1e-4, rtol=1e-4)
    assert jnp.allclose(c_n, ref_c, atol=1e-4, rtol=1e-4)

    print("KERNEL_OK")
</pallas_src>

<mosaic_0001>
module attributes {stable_mosaic.version = 11 : i64} {
  func.func @kernel(%arg0: memref<8xi32, #tpu.memory_space<smem>>, %arg1: memref<20x128xf32, #tpu.memory_space<vmem>>, %arg2: memref<32x128xf32, #tpu.memory_space<vmem>>, %arg3: memref<32x128xf32, #tpu.memory_space<vmem>>, %arg4: memref<32x128xf32, #tpu.memory_space<vmem>>, %arg5: memref<1x128xf32, #tpu.memory_space<vmem>>, %arg6: memref<32x128xf32, #tpu.memory_space<vmem>>, %arg7: memref<1x128xf32, #tpu.memory_space<vmem>>, %arg8: memref<8x128xf32, #tpu.memory_space<vmem>>, %arg9: memref<2x32xf32, #tpu.memory_space<vmem>>, %arg10: memref<2x32xf32, #tpu.memory_space<vmem>>, %arg11: memref<8x32xf32, #tpu.memory_space<vmem>>) attributes {dimension_semantics = [], scalar_prefetch = 0 : i64, scratch_operands = 1 : i64, tpu.core_type = #tpu.core_type<tc>} {
    %cst = arith.constant 0.000000e+00 : f32
    %0 = vector.broadcast %cst : f32 to vector<1x32xf32>
    %cst_0 = arith.constant 0.000000e+00 : f32
    %1 = vector.broadcast %cst_0 : f32 to vector<1x32xf32>
    %cst_1 = arith.constant 0.000000e+00 : f32
    %2 = vector.broadcast %cst_1 : f32 to vector<1x32xf32>
    %cst_2 = arith.constant 0.000000e+00 : f32
    %3 = vector.broadcast %cst_2 : f32 to vector<1x32xf32>
    %c0_i32 = arith.constant 0 : i32
    %c0_i32_3 = arith.constant 0 : i32
    %4 = arith.addi %c0_i32_3, %c0_i32 : i32
    %5 = arith.index_cast %4 : i32 to index
    %6 = memref.load %arg0[%5] : memref<8xi32, #tpu.memory_space<smem>>
    %c0 = arith.constant 0 : index
    %c0_4 = arith.constant 0 : index
    %7 = vector.load %arg2[%c0, %c0_4] : memref<32x128xf32, #tpu.memory_space<vmem>>, vector<32x128xf32>
    %cst_5 = arith.constant dense<0.000000e+00> : vector<1x128xf32>
    %8 = tpu.matmul %0, %7, %cst_5 {dimension_numbers = #tpu.dot_dimension_numbers<[1], [0], [0], [1], [0, 0, 1, 1], [], []>} : vector<1x32xf32>, vector<32x128xf32>, vector<1x128xf32> -> vector<1x128xf32>
    %c0_6 = arith.constant 0 : index
    %c0_7 = arith.constant 0 : index
    %9 = vector.load %arg4[%c0_6, %c0_7] : memref<32x128xf32, #tpu.memory_space<vmem>>, vector<32x128xf32>
    %cst_8 = arith.constant dense<0.000000e+00> : vector<1x128xf32>
    %10 = tpu.matmul %1, %9, %cst_8 {dimension_numbers = #tpu.dot_dimension_numbers<[1], [0], [0], [1], [0, 0, 1, 1], [], []>} : vector<1x32xf32>, vector<32x128xf32>, vector<1x128xf32> -> vector<1x128xf32>
    %c0_9 = arith.constant 0 : index
    %c0_10 = arith.constant 0 : index
    %11 = vector.load %arg5[%c0_9, %c0_10] : memref<1x128xf32, #tpu.memory_space<vmem>>, vector<1x128xf32>
    %12 = arith.addf %10, %11 : vector<1x128xf32>
    %13 = arith.index_cast %6 : i32 to index
    %c0_11 = arith.constant 0 : index
    %14 = vector.load %arg1[%13, %c0_11] : memref<20x128xf32, #tpu.memory_space<vmem>>, vector<1x128xf32>
    %15 = arith.addf %14, %8 : vector<1x128xf32>
    %16 = arith.negf %15 : vector<1x128xf32>
    %17 = math.exp %16 : vector<1x128xf32>
    %cst_12 = arith.constant 1.000000e+00 : f32
    %18 = vector.broadcast %cst_12 : f32 to vector<1x128xf32>
    %19 = arith.addf %18, %17 : vector<1x128xf32>
    %20 = arith.divf %18, %19 : vector<1x128xf32>
    %21 = vector.extract_strided_slice %20 {offsets = [0, 0], sizes = [1, 32], strides = [1, 1]} : vector<1x128xf32> to vector<1x32xf32>
    %22 = vector.extract_strided_slice %20 {offsets = [0, 32], sizes = [1, 32], strides = [1, 1]} : vector<1x128xf32> to vector<1x32xf32>
    %23 = vector.extract_strided_slice %20 {offsets = [0, 64], sizes = [1, 32], strides = [1, 1]} : vector<1x128xf32> to vector<1x32xf32>
    %cst_13 = arith.constant 2.000000e+00 : f32
    %24 = vector.broadcast %cst_13 : f32 to vector<1x32xf32>
    %25 = arith.mulf %24, %23 : vector<1x32xf32>
    %cst_14 = arith.constant 1.000000e+00 : f32
    %26 = vector.broadcast %cst_14 : f32 to vector<1x32xf32>
    %27 = arith.subf %25, %26 : vector<1x32xf32>
    %28 = vector.extract_strided_slice %20 {offsets = [0, 96], sizes = [1, 32], strides = [1, 1]} : vector<1x128xf32> to vector<1x32xf32>
    %29 = arith.mulf %22, %2 : vector<1x32xf32>
    %30 = arith.mulf %21, %27 : vector<1x32xf32>
    %31 = arith.addf %29, %30 : vector<1x32xf32>
    %32 = math.tanh %31 : vector<1x32xf32>
    %33 = arith.mulf %28, %32 : vector<1x32xf32>
    %c0_15 = arith.constant 0 : index
    %c0_16 = arith.constant 0 : index
    %34 = vector.load %arg3[%c0_15, %c0_16] : memref<32x128xf32, #tpu.memory_space<vmem>>, vector<32x128xf32>
    %cst_17 = arith.constant dense<0.000000e+00> : vector<1x128xf32>
    %35 = tpu.matmul %33, %34, %cst_17 {dimension_numbers = #tpu.dot_dimension_numbers<[1], [0], [0], [1], [0, 0, 1, 1], [], []>} : vector<1x32xf32>, vector<32x128xf32>, vector<1x128xf32> -> vector<1x128xf32>
    %36 = arith.addf %35, %12 : vector<1x128xf32>
    %37 = arith.negf %36 : vector<1x128xf32>
    %38 = math.exp %37 : vector<1x128xf32>
    %cst_18 = arith.constant 1.000000e+00 : f32
    %39 = vector.broadcast %cst_18 : f32 to vector<1x128xf32>
    %40 = arith.addf %39, %38 : vector<1x128xf32>
    %41 = arith.divf %39, %40 : vector<1x128xf32>
    %42 = vector.extract_strided_slice %41 {offsets = [0, 0], sizes = [1, 32], strides = [1, 1]} : vector<1x128xf32> to vector<1x32xf32>
    %43 = vector.extract_strided_slice %41 {offsets = [0, 32], sizes = [1, 32], strides = [1, 1]} : vector<1x128xf32> to vector<1x32xf32>
    %44 = vector.extract_strided_slice %41 {offsets = [0, 64], sizes = [1, 32], strides = [1, 1]} : vector<1x128xf32> to vector<1x32xf32>
    %cst_19 = arith.constant 2.000000e+00 : f32
    %45 = vector.broadcast %cst_19 : f32 to vector<1x32xf32>
    %46 = arith.mulf %45, %44 : vector<1x32xf32>
    %cst_20 = arith.constant 1.000000e+00 : f32
    %47 = vector.broadcast %cst_20 : f32 to vector<1x32xf32>
    %48 = arith.subf %46, %47 : vector<1x32xf32>
    %49 = vector.extract_strided_slice %41 {offsets = [0, 96], sizes = [1, 32], strides = [1, 1]} : vector<1x128xf32> to vector<1x32xf32>
    %50 = arith.mulf %43, %3 : vector<1x32xf32>
    %51 = arith.mulf %42, %48 : vector<1x32xf32>
    %52 = arith.addf %50, %51 : vector<1x32xf32>
    %53 = math.tanh %52 : vector<1x32xf32>
    %54 = arith.mulf %49, %53 : vector<1x32xf32>
    %55 = arith.index_cast %c0_i32 : i32 to index
    %c0_21 = arith.constant 0 : index
    %56 = vector.load %arg11[%55, %c0_21] : memref<8x32xf32, #tpu.memory_space<vmem>>, vector<1x32xf32>
    tpu.vector_store %arg11[%55, %c0_21], %54 {strides = array<i32>} : memref<8x32xf32, #tpu.memory_space<vmem>>, vector<1x32xf32>,
    %c1_i32 = arith.constant 1 : i32
    %c0_i32_22 = arith.constant 0 : i32
    %57 = arith.addi %c0_i32_22, %c1_i32 : i32
    %58 = arith.index_cast %57 : i32 to index
    %59 = memref.load %arg0[%58] : memref<8xi32, #tpu.memory_space<smem>>
    %c0_23 = arith.constant 0 : index
    %c0_24 = arith.constant 0 : index
    %60 = vector.load %arg2[%c0_23, %c0_24] : memref<32x128xf32, #tpu.memory_space<vmem>>, vector<32x128xf32>
    %cst_25 = arith.constant dense<0.000000e+00> : vector<1x128xf32>
    %61 = tpu.matmul %33, %60, %cst_25 {dimension_numbers = #tpu.dot_dimension_numbers<[1], [0], [0], [1], [0, 0, 1, 1], [], []>} : vector<1x32xf32>, vector<32x128xf32>, vector<1x128xf32> -> vector<1x128xf32>
    %c0_26 = arith.constant 0 : index
    %c0_27 = arith.constant 0 : index
    %62 = vector.load %arg4[%c0_26, %c0_27] : memref<32x128xf32, #tpu.memory_space<vmem>>, vector<32x128xf32>
    %cst_28 = arith.constant dense<0.000000e+00> : vector<1x128xf32>
    %63 = tpu.matmul %54, %62, %cst_28 {dimension_numbers = #tpu.dot_dimension_numbers<[1], [0], [0], [1], [0, 0, 1, 1], [], []>} : vector<1x32xf32>, vector<32x128xf32>, vector<1x128xf32> -> vector<1x128xf32>
    %c0_29 = arith.constant 0 : index
    %c0_30 = arith.constant 0 : index
    %64 = vector.load %arg5[%c0_29, %c0_30] : memref<1x128xf32, #tpu.memory_space<vmem>>, vector<1x128xf32>
    %65 = arith.addf %63, %64 : vector<1x128xf32>
    %66 = arith.index_cast %59 : i32 to index
    %c0_31 = arith.constant 0 : index
    %67 = vector.load %arg1[%66, %c0_31] : memref<20x128xf32, #tpu.memory_space<vmem>>, vector<1x128xf32>
    %68 = arith.addf %67, %61 : vector<1x128xf32>
    %69 = arith.negf %68 : vector<1x128xf32>
    %70 = math.exp %69 : vector<1x128xf32>
    %cst_32 = arith.constant 1.000000e+00 : f32
    %71 = vector.broadcast %cst_32 : f32 to vector<1x128xf32>
    %72 = arith.addf %71, %70 : vector<1x128xf32>
    %73 = arith.divf %71, %72 : vector<1x128xf32>
    %74 = vector.extract_strided_slice %73 {offsets = [0, 0], sizes = [1, 32], strides = [1, 1]} : vector<1x128xf32> to vector<1x32xf32>
    %75 = vector.extract_strided_slice %73 {offsets = [0, 32], sizes = [1, 32], strides = [1, 1]} : vector<1x128xf32> to vector<1x32xf32>
    %76 = vector.extract_strided_slice %73 {offsets = [0, 64], sizes = [1, 32], strides = [1, 1]} : vector<1x128xf32> to vector<1x32xf32>
    %cst_33 = arith.constant 2.000000e+00 : f32
    %77 = vector.broadcast %cst_33 : f32 to vector<1x32xf32>
    %78 = arith.mulf %77, %76 : vector<1x32xf32>
    %cst_34 = arith.constant 1.000000e+00 : f32
    %79 = vector.broadcast %cst_34 : f32 to vector<1x32xf32>
    %80 = arith.subf %78, %79 : vector<1x32xf32>
    %81 = vector.extract_strided_slice %73 {offsets = [0, 96], sizes = [1, 32], strides = [1, 1]} : vector<1x128xf32> to vector<1x32xf32>
    %82 = arith.mulf %75, %31 : vector<1x32xf32>
    %83 = arith.mulf %74, %80 : vector<1x32xf32>
    %84 = arith.addf %82, %83 : vector<1x32xf32>
    %85 = math.tanh %84 : vector<1x32xf32>
    %86 = arith.mulf %81, %85 : vector<1x32xf32>
    %c0_35 = arith.constant 0 : index
    %c0_36 = arith.constant 0 : index
    %87 = vector.load %arg3[%c0_35, %c0_36] : memref<32x128xf32, #tpu.memory_space<vmem>>, vector<32x128xf32>
    %cst_37 = arith.constant dense<0.000000e+00> : vector<1x128xf32>
    %88 = tpu.matmul %86, %87, %cst_37 {dimension_numbers = #tpu.dot_dimension_numbers<[1], [0], [0], [1], [0, 0, 1, 1], [], []>} : vector<1x32xf32>, vector<32x128xf32>, vector<1x128xf32> -> vector<1x128xf32>
    %89 = arith.addf %88, %65 : vector<1x128xf32>
    %90 = arith.negf %89 : vector<1x128xf32>
    %91 = math.exp %90 : vector<1x128xf32>
    %cst_38 = arith.constant 1.000000e+00 : f32
    %92 = vector.broadcast %cst_38 : f32 to vector<1x128xf32>
    %93 = arith.addf %92, %91 : vector<1x128xf32>
    %94 = arith.divf %92, %93 : vector<1x128xf32>
    %95 = vector.extract_strided_slice %94 {offsets = [0, 0], sizes = [1, 32], strides = [1, 1]} : vector<1x128xf32> to vector<1x32xf32>
    %96 = vector.extract_strided_slice %94 {offsets = [0, 32], sizes = [1, 32], strides = [1, 1]} : vector<1x128xf32> to vector<1x32xf32>
    %97 = vector.extract_strided_slice %94 {offsets = [0, 64], sizes = [1, 32], strides = [1, 1]} : vector<1x128xf32> to vector<1x32xf32>
    %cst_39 = arith.constant 2.000000e+00 : f32
    %98 = vector.broadcast %cst_39 : f32 to vector<1x32xf32>
    %99 = arith.mulf %98, %97 : vector<1x32xf32>
    %cst_40 = arith.constant 1.000000e+00 : f32
    %100 = vector.broadcast %cst_40 : f32 to vector<1x32xf32>
    %101 = arith.subf %99, %100 : vector<1x32xf32>
    %102 = vector.extract_strided_slice %94 {offsets = [0, 96], sizes = [1, 32], strides = [1, 1]} : vector<1x128xf32> to vector<1x32xf32>
    %103 = arith.mulf %96, %52 : vector<1x32xf32>
    %104 = arith.mulf %95, %101 : vector<1x32xf32>
    %105 = arith.addf %103, %104 : vector<1x32xf32>
    %106 = math.tanh %105 : vector<1x32xf32>
    %107 = arith.mulf %102, %106 : vector<1x32xf32>
    %108 = arith.index_cast %c1_i32 : i32 to index
    %c0_41 = arith.constant 0 : index
    %109 = vector.load %arg11[%108, %c0_41] : memref<8x32xf32, #tpu.memory_space<vmem>>, vector<1x32xf32>
    tpu.vector_store %arg11[%108, %c0_41], %107 {strides = array<i32>} : memref<8x32xf32, #tpu.memory_space<vmem>>, vector<1x32xf32>,
    %c2_i32 = arith.constant 2 : i32
    %c0_i32_42 = arith.constant 0 : i32
    %110 = arith.addi %c0_i32_42, %c2_i32 : i32
    %111 = arith.index_cast %110 : i32 to index
    %112 = memref.load %arg0[%111] : memref<8xi32, #tpu.memory_space<smem>>
    %c0_43 = arith.constant 0 : index
    %c0_44 = arith.constant 0 : index
    %113 = vector.load %arg2[%c0_43, %c0_44] : memref<32x128xf32, #tpu.memory_space<vmem>>, vector<32x128xf32>
    %cst_45 = arith.constant dense<0.000000e+00> : vector<1x128xf32>
    %114 = tpu.matmul %86, %113, %cst_45 {dimension_numbers = #tpu.dot_dimension_numbers<[1], [0], [0], [1], [0, 0, 1, 1], [], []>} : vector<1x32xf32>, vector<32x128xf32>, vector<1x128xf32> -> vector<1x128xf32>
    %c0_46 = arith.constant 0 : index
    %c0_47 = arith.constant 0 : index
    %115 = vector.load %arg4[%c0_46, %c0_47] : memref<32x128xf32, #tpu.memory_space<vmem>>, vector<32x128xf32>
    %cst_48 = arith.constant dense<0.000000e+00> : vector<1x128xf32>
    %116 = tpu.matmul %107, %115, %cst_48 {dimension_numbers = #tpu.dot_dimension_numbers<[1], [0], [0], [1], [0, 0, 1, 1], [], []>} : vector<1x32xf32>, vector<32x128xf32>, vector<1x128xf32> -> vector<1x128xf32>
    %c0_49 = arith.constant 0 : index
    %c0_50 = arith.constant 0 : index
    %117 = vector.load %arg5[%c0_49, %c0_50] : memref<1x128xf32, #tpu.memory_space<vmem>>, vector<1x128xf32>
    %118 = arith.addf %116, %117 : vector<1x128xf32>
    %119 = arith.index_cast %112 : i32 to index
    %c0_51 = arith.constant 0 : index
    %120 = vector.load %arg1[%119, %c0_51] : memref<20x128xf32, #tpu.memory_space<vmem>>, vector<1x128xf32>
    %121 = arith.addf %120, %114 : vector<1x128xf32>
    %122 = arith.negf %121 : vector<1x128xf32>
    %123 = math.exp %122 : vector<1x128xf32>
    %cst_52 = arith.constant 1.000000e+00 : f32
    %124 = vector.broadcast %cst_52 : f32 to vector<1x128xf32>
    %125 = arith.addf %124, %123 : vector<1x128xf32>
    %126 = arith.divf %124, %125 : vector<1x128xf32>
    %127 = vector.extract_strided_slice %126 {offsets = [0, 0], sizes = [1, 32], strides = [1, 1]} : vector<1x128xf32> to vector<1x32xf32>
    %128 = vector.extract_strided_slice %126 {offsets = [0, 32], sizes = [1, 32], strides = [1, 1]} : vector<1x128xf32> to vector<1x32xf32>
    %129 = vector.extract_strided_slice %126 {offsets = [0, 64], sizes = [1, 32], strides = [1, 1]} : vector<1x128xf32> to vector<1x32xf32>
    %cst_53 = arith.constant 2.000000e+00 : f32
    %130 = vector.broadcast %cst_53 : f32 to vector<1x32xf32>
    %131 = arith.mulf %130, %129 : vector<1x32xf32>
    %cst_54 = arith.constant 1.000000e+00 : f32
    %132 = vector.broadcast %cst_54 : f32 to vector<1x32xf32>
    %133 = arith.subf %131, %132 : vector<1x32xf32>
    %134 = vector.extract_strided_slice %126 {offsets = [0, 96], sizes = [1, 32], strides = [1, 1]} : vector<1x128xf32> to vector<1x32xf32>
    %135 = arith.mulf %128, %84 : vector<1x32xf32>
    %136 = arith.mulf %127, %133 : vector<1x32xf32>
    %137 = arith.addf %135, %136 : vector<1x32xf32>
    %138 = math.tanh %137 : vector<1x32xf32>
    %139 = arith.mulf %134, %138 : vector<1x32xf32>
    %c0_55 = arith.constant 0 : index
    %c0_56 = arith.constant 0 : index
    %140 = vector.load %arg3[%c0_55, %c0_56] : memref<32x128xf32, #tpu.memory_space<vmem>>, vector<32x128xf32>
    %cst_57 = arith.constant dense<0.000000e+00> : vector<1x128xf32>
    %141 = tpu.matmul %139, %140, %cst_57 {dimension_numbers = #tpu.dot_dimension_numbers<[1], [0], [0], [1], [0, 0, 1, 1], [], []>} : vector<1x32xf32>, vector<32x128xf32>, vector<1x128xf32> -> vector<1x128xf32>
    %142 = arith.addf %141, %118 : vector<1x128xf32>
    %143 = arith.negf %142 : vector<1x128xf32>
    %144 = math.exp %143 : vector<1x128xf32>
    %cst_58 = arith.constant 1.000000e+00 : f32
    %145 = vector.broadcast %cst_58 : f32 to vector<1x128xf32>
    %146 = arith.addf %145, %144 : vector<1x128xf32>
    %147 = arith.divf %145, %146 : vector<1x128xf32>
    %148 = vector.extract_strided_slice %147 {offsets = [0, 0], sizes = [1, 32], strides = [1, 1]} : vector<1x128xf32> to vector<1x32xf32>
    %149 = vector.extract_strided_slice %147 {offsets = [0, 32], sizes = [1, 32], strides = [1, 1]} : vector<1x128xf32> to vector<1x32xf32>
    %150 = vector.extract_strided_slice %147 {offsets = [0, 64], sizes = [1, 32], strides = [1, 1]} : vector<1x128xf32> to vector<1x32xf32>
    %cst_59 = arith.constant 2.000000e+00 : f32
    %151 = vector.broadcast %cst_59 : f32 to vector<1x32xf32>
    %152 = arith.mulf %151, %150 : vector<1x32xf32>
    %cst_60 = arith.constant 1.000000e+00 : f32
    %153 = vector.broadcast %cst_60 : f32 to vector<1x32xf32>
    %154 = arith.subf %152, %153 : vector<1x32xf32>
    %155 = vector.extract_strided_slice %147 {offsets = [0, 96], sizes = [1, 32], strides = [1, 1]} : vector<1x128xf32> to vector<1x32xf32>
    %156 = arith.mulf %149, %105 : vector<1x32xf32>
    %157 = arith.mulf %148, %154 : vector<1x32xf32>
    %158 = arith.addf %156, %157 : vector<1x32xf32>
    %159 = math.tanh %158 : vector<1x32xf32>
    %160 = arith.mulf %155, %159 : vector<1x32xf32>
    %161 = arith.index_cast %c2_i32 : i32 to index
    %c0_61 = arith.constant 0 : index
    %162 = vector.load %arg11[%161, %c0_61] : memref<8x32xf32, #tpu.memory_space<vmem>>, vector<1x32xf32>
    tpu.vector_store %arg11[%161, %c0_61], %160 {strides = array<i32>} : memref<8x32xf32, #tpu.memory_space<vmem>>, vector<1x32xf32>,
    %c3_i32 = arith.constant 3 : i32
    %c0_i32_62 = arith.constant 0 : i32
    %163 = arith.addi %c0_i32_62, %c3_i32 : i32
    %164 = arith.index_cast %163 : i32 to index
    %165 = memref.load %arg0[%164] : memref<8xi32, #tpu.memory_space<smem>>
    %c0_63 = arith.constant 0 : index
    %c0_64 = arith.constant 0 : index
    %166 = vector.load %arg2[%c0_63, %c0_64] : memref<32x128xf32, #tpu.memory_space<vmem>>, vector<32x128xf32>
    %cst_65 = arith.constant dense<0.000000e+00> : vector<1x128xf32>
    %167 = tpu.matmul %139, %166, %cst_65 {dimension_numbers = #tpu.dot_dimension_numbers<[1], [0], [0], [1], [0, 0, 1, 1], [], []>} : vector<1x32xf32>, vector<32x128xf32>, vector<1x128xf32> -> vector<1x128xf32>
    %c0_66 = arith.constant 0 : index
    %c0_67 = arith.constant 0 : index
    %168 = vector.load %arg4[%c0_66, %c0_67] : memref<32x128xf32, #tpu.memory_space<vmem>>, vector<32x128xf32>
    %cst_68 = arith.constant dense<0.000000e+00> : vector<1x128xf32>
    %169 = tpu.matmul %160, %168, %cst_68 {dimension_numbers = #tpu.dot_dimension_numbers<[1], [0], [0], [1], [0, 0, 1, 1], [], []>} : vector<1x32xf32>, vector<32x128xf32>, vector<1x128xf32> -> vector<1x128xf32>
    %c0_69 = arith.constant 0 : index
    %c0_70 = arith.constant 0 : index
    %170 = vector.load %arg5[%c0_69, %c0_70] : memref<1x128xf32, #tpu.memory_space<vmem>>, vector<1x128xf32>
    %171 = arith.addf %169, %170 : vector<1x128xf32>
    %172 = arith.index_cast %165 : i32 to index
    %c0_71 = arith.constant 0 : index
    %173 = vector.load %arg1[%172, %c0_71] : memref<20x128xf32, #tpu.memory_space<vmem>>, vector<1x128xf32>
    %174 = arith.addf %173, %167 : vector<1x128xf32>
    %175 = arith.negf %174 : vector<1x128xf32>
    %176 = math.exp %175 : vector<1x128xf32>
    %cst_72 = arith.constant 1.000000e+00 : f32
    %177 = vector.broadcast %cst_72 : f32 to vector<1x128xf32>
    %178 = arith.addf %177, %176 : vector<1x128xf32>
    %179 = arith.divf %177, %178 : vector<1x128xf32>
    %180 = vector.extract_strided_slice %179 {offsets = [0, 0], sizes = [1, 32], strides = [1, 1]} : vector<1x128xf32> to vector<1x32xf32>
    %181 = vector.extract_strided_slice %179 {offsets = [0, 32], sizes = [1, 32], strides = [1, 1]} : vector<1x128xf32> to vector<1x32xf32>
    %182 = vector.extract_strided_slice %179 {offsets = [0, 64], sizes = [1, 32], strides = [1, 1]} : vector<1x128xf32> to vector<1x32xf32>
    %cst_73 = arith.constant 2.000000e+00 : f32
    %183 = vector.broadcast %cst_73 : f32 to vector<1x32xf32>
    %184 = arith.mulf %183, %182 : vector<1x32xf32>
    %cst_74 = arith.constant 1.000000e+00 : f32
    %185 = vector.broadcast %cst_74 : f32 to vector<1x32xf32>
    %186 = arith.subf %184, %185 : vector<1x32xf32>
    %187 = vector.extract_strided_slice %179 {offsets = [0, 96], sizes = [1, 32], strides = [1, 1]} : vector<1x128xf32> to vector<1x32xf32>
    %188 = arith.mulf %181, %137 : vector<1x32xf32>
    %189 = arith.mulf %180, %186 : vector<1x32xf32>
    %190 = arith.addf %188, %189 : vector<1x32xf32>
    %191 = math.tanh %190 : vector<1x32xf32>
    %192 = arith.mulf %187, %191 : vector<1x32xf32>
    %c0_75 = arith.constant 0 : index
    %c0_76 = arith.constant 0 : index
    %193 = vector.load %arg3[%c0_75, %c0_76] : memref<32x128xf32, #tpu.memory_space<vmem>>, vector<32x128xf32>
    %cst_77 = arith.constant dense<0.000000e+00> : vector<1x128xf32>
    %194 = tpu.matmul %192, %193, %cst_77 {dimension_numbers = #tpu.dot_dimension_numbers<[1], [0], [0], [1], [0, 0, 1, 1], [], []>} : vector<1x32xf32>, vector<32x128xf32>, vector<1x128xf32> -> vector<1x128xf32>
    %195 = arith.addf %194, %171 : vector<1x128xf32>
    %196 = arith.negf %195 : vector<1x128xf32>
    %197 = math.exp %196 : vector<1x128xf32>
    %cst_78 = arith.constant 1.000000e+00 : f32
    %198 = vector.broadcast %cst_78 : f32 to vector<1x128xf32>
    %199 = arith.addf %198, %197 : vector<1x128xf32>
    %200 = arith.divf %198, %199 : vector<1x128xf32>
    %201 = vector.extract_strided_slice %200 {offsets = [0, 0], sizes = [1, 32], strides = [1, 1]} : vector<1x128xf32> to vector<1x32xf32>
    %202 = vector.extract_strided_slice %200 {offsets = [0, 32], sizes = [1, 32], strides = [1, 1]} : vector<1x128xf32> to vector<1x32xf32>
    %203 = vector.extract_strided_slice %200 {offsets = [0, 64], sizes = [1, 32], strides = [1, 1]} : vector<1x128xf32> to vector<1x32xf32>
    %cst_79 = arith.constant 2.000000e+00 : f32
    %204 = vector.broadcast %cst_79 : f32 to vector<1x32xf32>
    %205 = arith.mulf %204, %203 : vector<1x32xf32>
    %cst_80 = arith.constant 1.000000e+00 : f32
    %206 = vector.broadcast %cst_80 : f32 to vector<1x32xf32>
    %207 = arith.subf %205, %206 : vector<1x32xf32>
    %208 = vector.extract_strided_slice %200 {offsets = [0, 96], sizes = [1, 32], strides = [1, 1]} : vector<1x128xf32> to vector<1x32xf32>
    %209 = arith.mulf %202, %158 : vector<1x32xf32>
    %210 = arith.mulf %201, %207 : vector<1x32xf32>
    %211 = arith.addf %209, %210 : vector<1x32xf32>
    %212 = math.tanh %211 : vector<1x32xf32>
    %213 = arith.mulf %208, %212 : vector<1x32xf32>
    %214 = arith.index_cast %c3_i32 : i32 to index
    %c0_81 = arith.constant 0 : index
    %215 = vector.load %arg11[%214, %c0_81] : memref<8x32xf32, #tpu.memory_space<vmem>>, vector<1x32xf32>
    tpu.vector_store %arg11[%214, %c0_81], %213 {strides = array<i32>} : memref<8x32xf32, #tpu.memory_space<vmem>>, vector<1x32xf32>,
    %c4_i32 = arith.constant 4 : i32
    %c0_i32_82 = arith.constant 0 : i32
    %216 = arith.addi %c0_i32_82, %c4_i32 : i32
    %217 = arith.index_cast %216 : i32 to index
    %218 = memref.load %arg0[%217] : memref<8xi32, #tpu.memory_space<smem>>
    %c0_83 = arith.constant 0 : index
    %c0_84 = arith.constant 0 : index
    %219 = vector.load %arg2[%c0_83, %c0_84] : memref<32x128xf32, #tpu.memory_space<vmem>>, vector<32x128xf32>
    %cst_85 = arith.constant dense<0.000000e+00> : vector<1x128xf32>
    %220 = tpu.matmul %192, %219, %cst_85 {dimension_numbers = #tpu.dot_dimension_numbers<[1], [0], [0], [1], [0, 0, 1, 1], [], []>} : vector<1x32xf32>, vector<32x128xf32>, vector<1x128xf32> -> vector<1x128xf32>
    %c0_86 = arith.constant 0 : index
    %c0_87 = arith.constant 0 : index
    %221 = vector.load %arg4[%c0_86, %c0_87] : memref<32x128xf32, #tpu.memory_space<vmem>>, vector<32x128xf32>
    %cst_88 = arith.constant dense<0.000000e+00> : vector<1x128xf32>
    %222 = tpu.matmul %213, %221, %cst_88 {dimension_numbers = #tpu.dot_dimension_numbers<[1], [0], [0], [1], [0, 0, 1, 1], [], []>} : vector<1x32xf32>, vector<32x128xf32>, vector<1x128xf32> -> vector<1x128xf32>
    %c0_89 = arith.constant 0 : index
    %c0_90 = arith.constant 0 : index
    %223 = vector.load %arg5[%c0_89, %c0_90] : memref<1x128xf32, #tpu.memory_space<vmem>>, vector<1x128xf32>
    %224 = arith.addf %222, %223 : vector<1x128xf32>
    %225 = arith.index_cast %218 : i32 to index
    %c0_91 = arith.constant 0 : index
    %226 = vector.load %arg1[%225, %c0_91] : memref<20x128xf32, #tpu.memory_space<vmem>>, vector<1x128xf32>
    %227 = arith.addf %226, %220 : vector<1x128xf32>
    %228 = arith.negf %227 : vector<1x128xf32>
    %229 = math.exp %228 : vector<1x128xf32>
    %cst_92 = arith.constant 1.000000e+00 : f32
    %230 = vector.broadcast %cst_92 : f32 to vector<1x128xf32>
    %231 = arith.addf %230, %229 : vector<1x128xf32>
    %232 = arith.divf %230, %231 : vector<1x128xf32>
    %233 = vector.extract_strided_slice %232 {offsets = [0, 0], sizes = [1, 32], strides = [1, 1]} : vector<1x128xf32> to vector<1x32xf32>
    %234 = vector.extract_strided_slice %232 {offsets = [0, 32], sizes = [1, 32], strides = [1, 1]} : vector<1x128xf32> to vector<1x32xf32>
    %235 = vector.extract_strided_slice %232 {offsets = [0, 64], sizes = [1, 32], strides = [1, 1]} : vector<1x128xf32> to vector<1x32xf32>
    %cst_93 = arith.constant 2.000000e+00 : f32
    %236 = vector.broadcast %cst_93 : f32 to vector<1x32xf32>
    %237 = arith.mulf %236, %235 : vector<1x32xf32>
    %cst_94 = arith.constant 1.000000e+00 : f32
    %238 = vector.broadcast %cst_94 : f32 to vector<1x32xf32>
    %239 = arith.subf %237, %238 : vector<1x32xf32>
    %240 = vector.extract_strided_slice %232 {offsets = [0, 96], sizes = [1, 32], strides = [1, 1]} : vector<1x128xf32> to vector<1x32xf32>
    %241 = arith.mulf %234, %190 : vector<1x32xf32>
    %242 = arith.mulf %233, %239 : vector<1x32xf32>
    %243 = arith.addf %241, %242 : vector<1x32xf32>
    %244 = math.tanh %243 : vector<1x32xf32>
    %245 = arith.mulf %240, %244 : vector<1x32xf32>
    %c0_95 = arith.constant 0 : index
    %c0_96 = arith.constant 0 : index
    %246 = vector.load %arg3[%c0_95, %c0_96] : memref<32x128xf32, #tpu.memory_space<vmem>>, vector<32x128xf32>
    %cst_97 = arith.constant dense<0.000000e+00> : vector<1x128xf32>
    %247 = tpu.matmul %245, %246, %cst_97 {dimension_numbers = #tpu.dot_dimension_numbers<[1], [0], [0], [1], [0, 0, 1, 1], [], []>} : vector<1x32xf32>, vector<32x128xf32>, vector<1x128xf32> -> vector<1x128xf32>
    %248 = arith.addf %247, %224 : vector<1x128xf32>
    %249 = arith.negf %248 : vector<1x128xf32>
    %250 = math.exp %249 : vector<1x128xf32>
    %cst_98 = arith.constant 1.000000e+00 : f32
    %251 = vector.broadcast %cst_98 : f32 to vector<1x128xf32>
    %252 = arith.addf %251, %250 : vector<1x128xf32>
    %253 = arith.divf %251, %252 : vector<1x128xf32>
    %254 = vector.extract_strided_slice %253 {offsets = [0, 0], sizes = [1, 32], strides = [1, 1]} : vector<1x128xf32> to vector<1x32xf32>
    %255 = vector.extract_strided_slice %253 {offsets = [0, 32], sizes = [1, 32], strides = [1, 1]} : vector<1x128xf32> to vector<1x32xf32>
    %256 = vector.extract_strided_slice %253 {offsets = [0, 64], sizes = [1, 32], strides = [1, 1]} : vector<1x128xf32> to vector<1x32xf32>
    %cst_99 = arith.constant 2.000000e+00 : f32
    %257 = vector.broadcast %cst_99 : f32 to vector<1x32xf32>
    %258 = arith.mulf %257, %256 : vector<1x32xf32>
    %cst_100 = arith.constant 1.000000e+00 : f32
    %259 = vector.broadcast %cst_100 : f32 to vector<1x32xf32>
    %260 = arith.subf %258, %259 : vector<1x32xf32>
    %261 = vector.extract_strided_slice %253 {offsets = [0, 96], sizes = [1, 32], strides = [1, 1]} : vector<1x128xf32> to vector<1x32xf32>
    %262 = arith.mulf %255, %211 : vector<1x32xf32>
    %263 = arith.mulf %254, %260 : vector<1x32xf32>
    %264 = arith.addf %262, %263 : vector<1x32xf32>
    %265 = math.tanh %264 : vector<1x32xf32>
    %266 = arith.mulf %261, %265 : vector<1x32xf32>
    %267 = arith.index_cast %c4_i32 : i32 to index
    %c0_101 = arith.constant 0 : index
    %268 = vector.load %arg11[%267, %c0_101] : memref<8x32xf32, #tpu.memory_space<vmem>>, vector<1x32xf32>
    tpu.vector_store %arg11[%267, %c0_101], %266 {strides = array<i32>} : memref<8x32xf32, #tpu.memory_space<vmem>>, vector<1x32xf32>,
    %c5_i32 = arith.constant 5 : i32
    %c0_i32_102 = arith.constant 0 : i32
    %269 = arith.addi %c0_i32_102, %c5_i32 : i32
    %270 = arith.index_cast %269 : i32 to index
    %271 = memref.load %arg0[%270] : memref<8xi32, #tpu.memory_space<smem>>
    %c0_103 = arith.constant 0 : index
    %c0_104 = arith.constant 0 : index
    %272 = vector.load %arg2[%c0_103, %c0_104] : memref<32x128xf32, #tpu.memory_space<vmem>>, vector<32x128xf32>
    %cst_105 = arith.constant dense<0.000000e+00> : vector<1x128xf32>
    %273 = tpu.matmul %245, %272, %cst_105 {dimension_numbers = #tpu.dot_dimension_numbers<[1], [0], [0], [1], [0, 0, 1, 1], [], []>} : vector<1x32xf32>, vector<32x128xf32>, vector<1x128xf32> -> vector<1x128xf32>
    %c0_106 = arith.constant 0 : index
    %c0_107 = arith.constant 0 : index
    %274 = vector.load %arg4[%c0_106, %c0_107] : memref<32x128xf32, #tpu.memory_space<vmem>>, vector<32x128xf32>
    %cst_108 = arith.constant dense<0.000000e+00> : vector<1x128xf32>
    %275 = tpu.matmul %266, %274, %cst_108 {dimension_numbers = #tpu.dot_dimension_numbers<[1], [0], [0], [1], [0, 0, 1, 1], [], []>} : vector<1x32xf32>, vector<32x128xf32>, vector<1x128xf32> -> vector<1x128xf32>
    %c0_109 = arith.constant 0 : index
    %c0_110 = arith.constant 0 : index
    %276 = vector.load %arg5[%c0_109, %c0_110] : memref<1x128xf32, #tpu.memory_space<vmem>>, vector<1x128xf32>
    %277 = arith.addf %275, %276 : vector<1x128xf32>
    %278 = arith.index_cast %271 : i32 to index
    %c0_111 = arith.constant 0 : index
    %279 = vector.load %arg1[%278, %c0_111] : memref<20x128xf32, #tpu.memory_space<vmem>>, vector<1x128xf32>
    %280 = arith.addf %279, %273 : vector<1x128xf32>
    %281 = arith.negf %280 : vector<1x128xf32>
    %282 = math.exp %281 : vector<1x128xf32>
    %cst_112 = arith.constant 1.000000e+00 : f32
    %283 = vector.broadcast %cst_112 : f32 to vector<1x128xf32>
    %284 = arith.addf %283, %282 : vector<1x128xf32>
    %285 = arith.divf %283, %284 : vector<1x128xf32>
    %286 = vector.extract_strided_slice %285 {offsets = [0, 0], sizes = [1, 32], strides = [1, 1]} : vector<1x128xf32> to vector<1x32xf32>
    %287 = vector.extract_strided_slice %285 {offsets = [0, 32], sizes = [1, 32], strides = [1, 1]} : vector<1x128xf32> to vector<1x32xf32>
    %288 = vector.extract_strided_slice %285 {offsets = [0, 64], sizes = [1, 32], strides = [1, 1]} : vector<1x128xf32> to vector<1x32xf32>
    %cst_113 = arith.constant 2.000000e+00 : f32
    %289 = vector.broadcast %cst_113 : f32 to vector<1x32xf32>
    %290 = arith.mulf %289, %288 : vector<1x32xf32>
    %cst_114 = arith.constant 1.000000e+00 : f32
    %291 = vector.broadcast %cst_114 : f32 to vector<1x32xf32>
    %292 = arith.subf %290, %291 : vector<1x32xf32>
    %293 = vector.extract_strided_slice %285 {offsets = [0, 96], sizes = [1, 32], strides = [1, 1]} : vector<1x128xf32> to vector<1x32xf32>
    %294 = arith.mulf %287, %243 : vector<1x32xf32>
    %295 = arith.mulf %286, %292 : vector<1x32xf32>
    %296 = arith.addf %294, %295 : vector<1x32xf32>
    %297 = math.tanh %296 : vector<1x32xf32>
    %298 = arith.mulf %293, %297 : vector<1x32xf32>
    %c0_115 = arith.constant 0 : index
    %c0_116 = arith.constant 0 : index
    %299 = vector.load %arg3[%c0_115, %c0_116] : memref<32x128xf32, #tpu.memory_space<vmem>>, vector<32x128xf32>
    %cst_117 = arith.constant dense<0.000000e+00> : vector<1x128xf32>
    %300 = tpu.matmul %298, %299, %cst_117 {dimension_numbers = #tpu.dot_dimension_numbers<[1], [0], [0], [1], [0, 0, 1, 1], [], []>} : vector<1x32xf32>, vector<32x128xf32>, vector<1x128xf32> -> vector<1x128xf32>
    %301 = arith.addf %300, %277 : vector<1x128xf32>
    %302 = arith.negf %301 : vector<1x128xf32>
    %303 = math.exp %302 : vector<1x128xf32>
    %cst_118 = arith.constant 1.000000e+00 : f32
    %304 = vector.broadcast %cst_118 : f32 to vector<1x128xf32>
    %305 = arith.addf %304, %303 : vector<1x128xf32>
    %306 = arith.divf %304, %305 : vector<1x128xf32>
    %307 = vector.extract_strided_slice %306 {offsets = [0, 0], sizes = [1, 32], strides = [1, 1]} : vector<1x128xf32> to vector<1x32xf32>
    %308 = vector.extract_strided_slice %306 {offsets = [0, 32], sizes = [1, 32], strides = [1, 1]} : vector<1x128xf32> to vector<1x32xf32>
    %309 = vector.extract_strided_slice %306 {offsets = [0, 64], sizes = [1, 32], strides = [1, 1]} : vector<1x128xf32> to vector<1x32xf32>
    %cst_119 = arith.constant 2.000000e+00 : f32
    %310 = vector.broadcast %cst_119 : f32 to vector<1x32xf32>
    %311 = arith.mulf %310, %309 : vector<1x32xf32>
    %cst_120 = arith.constant 1.000000e+00 : f32
    %312 = vector.broadcast %cst_120 : f32 to vector<1x32xf32>
    %313 = arith.subf %311, %312 : vector<1x32xf32>
    %314 = vector.extract_strided_slice %306 {offsets = [0, 96], sizes = [1, 32], strides = [1, 1]} : vector<1x128xf32> to vector<1x32xf32>
    %315 = arith.mulf %308, %264 : vector<1x32xf32>
    %316 = arith.mulf %307, %313 : vector<1x32xf32>
    %317 = arith.addf %315, %316 : vector<1x32xf32>
    %318 = math.tanh %317 : vector<1x32xf32>
    %319 = arith.mulf %314, %318 : vector<1x32xf32>
    %320 = arith.index_cast %c5_i32 : i32 to index
    %c0_121 = arith.constant 0 : index
    %321 = vector.load %arg11[%320, %c0_121] : memref<8x32xf32, #tpu.memory_space<vmem>>, vector<1x32xf32>
    tpu.vector_store %arg11[%320, %c0_121], %319 {strides = array<i32>} : memref<8x32xf32, #tpu.memory_space<vmem>>, vector<1x32xf32>,
    %c6_i32 = arith.constant 6 : i32
    %c0_i32_122 = arith.constant 0 : i32
    %322 = arith.addi %c0_i32_122, %c6_i32 : i32
    %323 = arith.index_cast %322 : i32 to index
    %324 = memref.load %arg0[%323] : memref<8xi32, #tpu.memory_space<smem>>
    %c0_123 = arith.constant 0 : index
    %c0_124 = arith.constant 0 : index
    %325 = vector.load %arg2[%c0_123, %c0_124] : memref<32x128xf32, #tpu.memory_space<vmem>>, vector<32x128xf32>
    %cst_125 = arith.constant dense<0.000000e+00> : vector<1x128xf32>
    %326 = tpu.matmul %298, %325, %cst_125 {dimension_numbers = #tpu.dot_dimension_numbers<[1], [0], [0], [1], [0, 0, 1, 1], [], []>} : vector<1x32xf32>, vector<32x128xf32>, vector<1x128xf32> -> vector<1x128xf32>
    %c0_126 = arith.constant 0 : index
    %c0_127 = arith.constant 0 : index
    %327 = vector.load %arg4[%c0_126, %c0_127] : memref<32x128xf32, #tpu.memory_space<vmem>>, vector<32x128xf32>
    %cst_128 = arith.constant dense<0.000000e+00> : vector<1x128xf32>
    %328 = tpu.matmul %319, %327, %cst_128 {dimension_numbers = #tpu.dot_dimension_numbers<[1], [0], [0], [1], [0, 0, 1, 1], [], []>} : vector<1x32xf32>, vector<32x128xf32>, vector<1x128xf32> -> vector<1x128xf32>
    %c0_129 = arith.constant 0 : index
    %c0_130 = arith.constant 0 : index
    %329 = vector.load %arg5[%c0_129, %c0_130] : memref<1x128xf32, #tpu.memory_space<vmem>>, vector<1x128xf32>
    %330 = arith.addf %328, %329 : vector<1x128xf32>
    %331 = arith.index_cast %324 : i32 to index
    %c0_131 = arith.constant 0 : index
    %332 = vector.load %arg1[%331, %c0_131] : memref<20x128xf32, #tpu.memory_space<vmem>>, vector<1x128xf32>
    %333 = arith.addf %332, %326 : vector<1x128xf32>
    %334 = arith.negf %333 : vector<1x128xf32>
    %335 = math.exp %334 : vector<1x128xf32>
    %cst_132 = arith.constant 1.000000e+00 : f32
    %336 = vector.broadcast %cst_132 : f32 to vector<1x128xf32>
    %337 = arith.addf %336, %335 : vector<1x128xf32>
    %338 = arith.divf %336, %337 : vector<1x128xf32>
    %339 = vector.extract_strided_slice %338 {offsets = [0, 0], sizes = [1, 32], strides = [1, 1]} : vector<1x128xf32> to vector<1x32xf32>
    %340 = vector.extract_strided_slice %338 {offsets = [0, 32], sizes = [1, 32], strides = [1, 1]} : vector<1x128xf32> to vector<1x32xf32>
    %341 = vector.extract_strided_slice %338 {offsets = [0, 64], sizes = [1, 32], strides = [1, 1]} : vector<1x128xf32> to vector<1x32xf32>
    %cst_133 = arith.constant 2.000000e+00 : f32
    %342 = vector.broadcast %cst_133 : f32 to vector<1x32xf32>
    %343 = arith.mulf %342, %341 : vector<1x32xf32>
    %cst_134 = arith.constant 1.000000e+00 : f32
    %344 = vector.broadcast %cst_134 : f32 to vector<1x32xf32>
    %345 = arith.subf %343, %344 : vector<1x32xf32>
    %346 = vector.extract_strided_slice %338 {offsets = [0, 96], sizes = [1, 32], strides = [1, 1]} : vector<1x128xf32> to vector<1x32xf32>
    %347 = arith.mulf %340, %296 : vector<1x32xf32>
    %348 = arith.mulf %339, %345 : vector<1x32xf32>
    %349 = arith.addf %347, %348 : vector<1x32xf32>
    %350 = math.tanh %349 : vector<1x32xf32>
    %351 = arith.mulf %346, %350 : vector<1x32xf32>
    %c0_135 = arith.constant 0 : index
    %c0_136 = arith.constant 0 : index
    %352 = vector.load %arg3[%c0_135, %c0_136] : memref<32x128xf32, #tpu.memory_space<vmem>>, vector<32x128xf32>
    %cst_137 = arith.constant dense<0.000000e+00> : vector<1x128xf32>
    %353 = tpu.matmul %351, %352, %cst_137 {dimension_numbers = #tpu.dot_dimension_numbers<[1], [0], [0], [1], [0, 0, 1, 1], [], []>} : vector<1x32xf32>, vector<32x128xf32>, vector<1x128xf32> -> vector<1x128xf32>
    %354 = arith.addf %353, %330 : vector<1x128xf32>
    %355 = arith.negf %354 : vector<1x128xf32>
    %356 = math.exp %355 : vector<1x128xf32>
    %cst_138 = arith.constant 1.000000e+00 : f32
    %357 = vector.broadcast %cst_138 : f32 to vector<1x128xf32>
    %358 = arith.addf %357, %356 : vector<1x128xf32>
    %359 = arith.divf %357, %358 : vector<1x128xf32>
    %360 = vector.extract_strided_slice %359 {offsets = [0, 0], sizes = [1, 32], strides = [1, 1]} : vector<1x128xf32> to vector<1x32xf32>
    %361 = vector.extract_strided_slice %359 {offsets = [0, 32], sizes = [1, 32], strides = [1, 1]} : vector<1x128xf32> to vector<1x32xf32>
    %362 = vector.extract_strided_slice %359 {offsets = [0, 64], sizes = [1, 32], strides = [1, 1]} : vector<1x128xf32> to vector<1x32xf32>
    %cst_139 = arith.constant 2.000000e+00 : f32
    %363 = vector.broadcast %cst_139 : f32 to vector<1x32xf32>
    %364 = arith.mulf %363, %362 : vector<1x32xf32>
    %cst_140 = arith.constant 1.000000e+00 : f32
    %365 = vector.broadcast %cst_140 : f32 to vector<1x32xf32>
    %366 = arith.subf %364, %365 : vector<1x32xf32>
    %367 = vector.extract_strided_slice %359 {offsets = [0, 96], sizes = [1, 32], strides = [1, 1]} : vector<1x128xf32> to vector<1x32xf32>
    %368 = arith.mulf %361, %317 : vector<1x32xf32>
    %369 = arith.mulf %360, %366 : vector<1x32xf32>
    %370 = arith.addf %368, %369 : vector<1x32xf32>
    %371 = math.tanh %370 : vector<1x32xf32>
    %372 = arith.mulf %367, %371 : vector<1x32xf32>
    %373 = arith.index_cast %c6_i32 : i32 to index
    %c0_141 = arith.constant 0 : index
    %374 = vector.load %arg11[%373, %c0_141] : memref<8x32xf32, #tpu.memory_space<vmem>>, vector<1x32xf32>
    tpu.vector_store %arg11[%373, %c0_141], %372 {strides = array<i32>} : memref<8x32xf32, #tpu.memory_space<vmem>>, vector<1x32xf32>,
    %c7_i32 = arith.constant 7 : i32
    %c0_i32_142 = arith.constant 0 : i32
    %375 = arith.addi %c0_i32_142, %c7_i32 : i32
    %376 = arith.index_cast %375 : i32 to index
    %377 = memref.load %arg0[%376] : memref<8xi32, #tpu.memory_space<smem>>
    %c0_143 = arith.constant 0 : index
    %c0_144 = arith.constant 0 : index
    %378 = vector.load %arg2[%c0_143, %c0_144] : memref<32x128xf32, #tpu.memory_space<vmem>>, vector<32x128xf32>
    %cst_145 = arith.constant dense<0.000000e+00> : vector<1x128xf32>
    %379 = tpu.matmul %351, %378, %cst_145 {dimension_numbers = #tpu.dot_dimension_numbers<[1], [0], [0], [1], [0, 0, 1, 1], [], []>} : vector<1x32xf32>, vector<32x128xf32>, vector<1x128xf32> -> vector<1x128xf32>
    %c0_146 = arith.constant 0 : index
    %c0_147 = arith.constant 0 : index
    %380 = vector.load %arg4[%c0_146, %c0_147] : memref<32x128xf32, #tpu.memory_space<vmem>>, vector<32x128xf32>
    %cst_148 = arith.constant dense<0.000000e+00> : vector<1x128xf32>
    %381 = tpu.matmul %372, %380, %cst_148 {dimension_numbers = #tpu.dot_dimension_numbers<[1], [0], [0], [1], [0, 0, 1, 1], [], []>} : vector<1x32xf32>, vector<32x128xf32>, vector<1x128xf32> -> vector<1x128xf32>
    %c0_149 = arith.constant 0 : index
    %c0_150 = arith.constant 0 : index
    %382 = vector.load %arg5[%c0_149, %c0_150] : memref<1x128xf32, #tpu.memory_space<vmem>>, vector<1x128xf32>
    %383 = arith.addf %381, %382 : vector<1x128xf32>
    %384 = arith.index_cast %377 : i32 to index
    %c0_151 = arith.constant 0 : index
    %385 = vector.load %arg1[%384, %c0_151] : memref<20x128xf32, #tpu.memory_space<vmem>>, vector<1x128xf32>
    %386 = arith.addf %385, %379 : vector<1x128xf32>
    %387 = arith.negf %386 : vector<1x128xf32>
    %388 = math.exp %387 : vector<1x128xf32>
    %cst_152 = arith.constant 1.000000e+00 : f32
    %389 = vector.broadcast %cst_152 : f32 to vector<1x128xf32>
    %390 = arith.addf %389, %388 : vector<1x128xf32>
    %391 = arith.divf %389, %390 : vector<1x128xf32>
    %392 = vector.extract_strided_slice %391 {offsets = [0, 0], sizes = [1, 32], strides = [1, 1]} : vector<1x128xf32> to vector<1x32xf32>
    %393 = vector.extract_strided_slice %391 {offsets = [0, 32], sizes = [1, 32], strides = [1, 1]} : vector<1x128xf32> to vector<1x32xf32>
    %394 = vector.extract_strided_slice %391 {offsets = [0, 64], sizes = [1, 32], strides = [1, 1]} : vector<1x128xf32> to vector<1x32xf32>
    %cst_153 = arith.constant 2.000000e+00 : f32
    %395 = vector.broadcast %cst_153 : f32 to vector<1x32xf32>
    %396 = arith.mulf %395, %394 : vector<1x32xf32>
    %cst_154 = arith.constant 1.000000e+00 : f32
    %397 = vector.broadcast %cst_154 : f32 to vector<1x32xf32>
    %398 = arith.subf %396, %397 : vector<1x32xf32>
    %399 = vector.extract_strided_slice %391 {offsets = [0, 96], sizes = [1, 32], strides = [1, 1]} : vector<1x128xf32> to vector<1x32xf32>
    %400 = arith.mulf %393, %349 : vector<1x32xf32>
    %401 = arith.mulf %392, %398 : vector<1x32xf32>
    %402 = arith.addf %400, %401 : vector<1x32xf32>
    %403 = math.tanh %402 : vector<1x32xf32>
    %404 = arith.mulf %399, %403 : vector<1x32xf32>
    %c0_155 = arith.constant 0 : index
    %c0_156 = arith.constant 0 : index
    %405 = vector.load %arg3[%c0_155, %c0_156] : memref<32x128xf32, #tpu.memory_space<vmem>>, vector<32x128xf32>
    %cst_157 = arith.constant dense<0.000000e+00> : vector<1x128xf32>
    %406 = tpu.matmul %404, %405, %cst_157 {dimension_numbers = #tpu.dot_dimension_numbers<[1], [0], [0], [1], [0, 0, 1, 1], [], []>} : vector<1x32xf32>, vector<32x128xf32>, vector<1x128xf32> -> vector<1x128xf32>
    %407 = arith.addf %406, %383 : vector<1x128xf32>
    %408 = arith.negf %407 : vector<1x128xf32>
    %409 = math.exp %408 : vector<1x128xf32>
    %cst_158 = arith.constant 1.000000e+00 : f32
    %410 = vector.broadcast %cst_158 : f32 to vector<1x128xf32>
    %411 = arith.addf %410, %409 : vector<1x128xf32>
    %412 = arith.divf %410, %411 : vector<1x128xf32>
    %413 = vector.extract_strided_slice %412 {offsets = [0, 0], sizes = [1, 32], strides = [1, 1]} : vector<1x128xf32> to vector<1x32xf32>
    %414 = vector.extract_strided_slice %412 {offsets = [0, 32], sizes = [1, 32], strides = [1, 1]} : vector<1x128xf32> to vector<1x32xf32>
    %415 = vector.extract_strided_slice %412 {offsets = [0, 64], sizes = [1, 32], strides = [1, 1]} : vector<1x128xf32> to vector<1x32xf32>
    %cst_159 = arith.constant 2.000000e+00 : f32
    %416 = vector.broadcast %cst_159 : f32 to vector<1x32xf32>
    %417 = arith.mulf %416, %415 : vector<1x32xf32>
    %cst_160 = arith.constant 1.000000e+00 : f32
    %418 = vector.broadcast %cst_160 : f32 to vector<1x32xf32>
    %419 = arith.subf %417, %418 : vector<1x32xf32>
    %420 = vector.extract_strided_slice %412 {offsets = [0, 96], sizes = [1, 32], strides = [1, 1]} : vector<1x128xf32> to vector<1x32xf32>
    %421 = arith.mulf %414, %370 : vector<1x32xf32>
    %422 = arith.mulf %413, %419 : vector<1x32xf32>
    %423 = arith.addf %421, %422 : vector<1x32xf32>
    %424 = math.tanh %423 : vector<1x32xf32>
    %425 = arith.mulf %420, %424 : vector<1x32xf32>
    %426 = arith.index_cast %c7_i32 : i32 to index
    %c0_161 = arith.constant 0 : index
    %427 = vector.load %arg11[%426, %c0_161] : memref<8x32xf32, #tpu.memory_space<vmem>>, vector<1x32xf32>
    tpu.vector_store %arg11[%426, %c0_161], %425 {strides = array<i32>} : memref<8x32xf32, #tpu.memory_space<vmem>>, vector<1x32xf32>,
    %c8_i32 = arith.constant 8 : i32
    %c0_162 = arith.constant 0 : index
    %c0_163 = arith.constant 0 : index
    %428 = vector.load %arg11[%c0_162, %c0_163] : memref<8x32xf32, #tpu.memory_space<vmem>>, vector<8x32xf32>
    %c0_164 = arith.constant 0 : index
    %c0_165 = arith.constant 0 : index
    %429 = vector.load %arg6[%c0_164, %c0_165] : memref<32x128xf32, #tpu.memory_space<vmem>>, vector<32x128xf32>
    %cst_166 = arith.constant dense<0.000000e+00> : vector<8x128xf32>
    %430 = tpu.matmul %428, %429, %cst_166 {dimension_numbers = #tpu.dot_dimension_numbers<[1], [0], [0], [1], [0, 0, 1, 1], [], []>} : vector<8x32xf32>, vector<32x128xf32>, vector<8x128xf32> -> vector<8x128xf32>
    %c0_167 = arith.constant 0 : index
    %c0_168 = arith.constant 0 : index
    %431 = vector.load %arg7[%c0_167, %c0_168] : memref<1x128xf32, #tpu.memory_space<vmem>>, vector<1x128xf32>
    %432 = vector.broadcast %431 : vector<1x128xf32> to vector<8x128xf32>
    %433 = arith.addf %430, %432 : vector<8x128xf32>
    %c0_169 = arith.constant 0 : index
    %c0_170 = arith.constant 0 : index
    %434 = vector.load %arg8[%c0_169, %c0_170] : memref<8x128xf32, #tpu.memory_space<vmem>>, vector<8x128xf32>
    tpu.vector_store %arg8[%c0_169, %c0_170], %433 {strides = array<i32>} : memref<8x128xf32, #tpu.memory_space<vmem>>, vector<8x128xf32>,
    %435 = tpu.concatenate %404, %425 in 0 : vector<1x32xf32>, vector<1x32xf32> -> vector<2x32xf32>
    %c0_171 = arith.constant 0 : index
    %c0_172 = arith.constant 0 : index
    %436 = vector.load %arg9[%c0_171, %c0_172] : memref<2x32xf32, #tpu.memory_space<vmem>>, vector<2x32xf32>
    tpu.vector_store %arg9[%c0_171, %c0_172], %435 {strides = array<i32>} : memref<2x32xf32, #tpu.memory_space<vmem>>, vector<2x32xf32>,
    %437 = tpu.concatenate %402, %423 in 0 : vector<1x32xf32>, vector<1x32xf32> -> vector<2x32xf32>
    %c0_173 = arith.constant 0 : index
    %c0_174 = arith.constant 0 : index
    %438 = vector.load %arg10[%c0_173, %c0_174] : memref<2x32xf32, #tpu.memory_space<vmem>>, vector<2x32xf32>
    tpu.vector_store %arg10[%c0_173, %c0_174], %437 {strides = array<i32>} : memref<2x32xf32, #tpu.memory_space<vmem>>, vector<2x32xf32>,
    return
  }
}

</mosaic_0001>

<llo_original>
// kernel: torch_lstm_forward.1
$region0: #{torch_lstm_forward.1}
  #allocation0 [shape = 'u32[]', space=smem, size = 0x4, offset = 0x4, fixed_abs, tag = 'smem constant byte address 0x4 - core index']
  #allocation1 [shape = 'u32[72,128]{1,0:T(1,128)}', space=vmem, size = 0x9000, scoped, tag = 'internal scratch']
  #allocation2 [shape = 'f32[8,32]{1,0:T(8,128)}', space=vmem, size = 0x1000, scoped, tag = 'scratch operand']
  %s0 = inlined_call_operand.vmem [shape: s32[8], index: 0, kind: input, shape index: {}]
  %s1 = inlined_call_operand.vmem [shape: f32[20,128], index: 1, kind: input, shape index: {}]
  %s2 = inlined_call_operand.vmem [shape: f32[32,128], index: 2, kind: input, shape index: {}]
  %s3 = inlined_call_operand.vmem [shape: f32[32,128], index: 3, kind: input, shape index: {}]
  %s4 = inlined_call_operand.vmem [shape: f32[32,128], index: 4, kind: input, shape index: {}]
  %s5 = inlined_call_operand.vmem [shape: f32[1,128], index: 5, kind: input, shape index: {}]
  %s6 = inlined_call_operand.vmem [shape: f32[32,128], index: 6, kind: input, shape index: {}]
  %s7 = inlined_call_operand.vmem [shape: f32[1,128], index: 7, kind: input, shape index: {}]
  %s8 = inlined_call_operand.hbm [shape: f32[8,128], index: 8, kind: output, shape index: {0}]
  %s9 = inlined_call_operand.hbm [shape: f32[2,32], index: 9, kind: output, shape index: {1}]
  %s10 = inlined_call_operand.hbm [shape: f32[2,32], index: 10, kind: output, shape index: {2}]
  %11 = xla_tuple %s8, %s9, %s10
  %s12 = sld [smem:[#allocation0]]
  $region62: #{torch_lstm_forward.1} parent=0
    _
  %s14 = ssub.s32 1, %s12
  %s15 = scalar_select 0, %s14, %s12
  $region1: #{torch_lstm_forward.1} parent=0
    #allocation3 [shape = 'u8[512]{0}', space=smem, size = 0x200, scoped, tag = 'input window, operand 0, single buffered']
    #allocation4 [shape = 's32[1]{0}', space=sflag, size = 0x4, scoped, tag = 'scoped memory for torch_lstm_forward.1']
    #allocation5 [shape = 's32[1]{0}', space=sflag, size = 0x4, scoped, tag = 'scoped memory for torch_lstm_forward.1']
    #allocation6 [shape = 'u8[4096]{0}', space=vmem, size = 0x1000, scoped, tag = 'output window, operand 0, single buffered']
    #allocation7 [shape = 'u8[1024]{0}', space=vmem, size = 0x400, scoped, tag = 'output window, operand 1, single buffered']
    #allocation8 [shape = 's32[1]{0}', space=sflag, size = 0x4, scoped, tag = 'scoped memory for torch_lstm_forward.1']
    #allocation9 [shape = 'u8[1024]{0}', space=vmem, size = 0x400, scoped, tag = 'output window, operand 2, single buffered']
    %16 = vsyncpa [#allocation5], 0
    %17 = vsyncpa [#allocation4], 0
    %18 = vsyncpa [#allocation8], 0
    // Predicated region
    $region2: #{torch_lstm_forward.1} parent=1 // pred_check
      _
    $region3: #{torch_lstm_forward.1} parent=1 // pred_check_branch
      %20 = sbr.rel (0) target = $region5
    $region4: #{torch_lstm_forward.1} parent=1 // pred_region
      %22 = vsyncadd [#allocation5], 0
      %s24 = sshll.u32 %s0, 4
      %s25 = int_to_ptr.vmem [resolvable:$true] %s24
      %27 = dma.vmem_to_smem %s25, 16, [#allocation3], [#allocation5]
    $region5: #{torch_lstm_forward.1} parent=1 // pred_fallthru
      _
    // Predicated region
    $region6: #{torch_lstm_forward.1} parent=1 // pred_check
      _
    $region7: #{torch_lstm_forward.1} parent=1 // pred_check_branch
      %29 = sbr.rel (0) target = $region9
    $region8: #{torch_lstm_forward.1} parent=1 // pred_region
      _
    $region9: #{torch_lstm_forward.1} parent=1 // pred_fallthru
      _
    // Predicated region
    $region10: #{torch_lstm_forward.1} parent=1 // pred_check
      _
    $region11: #{torch_lstm_forward.1} parent=1 // pred_check_branch
      %31 = sbr.rel (0) target = $region13
    $region12: #{torch_lstm_forward.1} parent=1 // pred_region
      _
    $region13: #{torch_lstm_forward.1} parent=1 // pred_fallthru
      _
    // Predicated region
    $region14: #{torch_lstm_forward.1} parent=1 // pred_check
      _
    $region15: #{torch_lstm_forward.1} parent=1 // pred_check_branch
      %33 = sbr.rel (0) target = $region17
    $region16: #{torch_lstm_forward.1} parent=1 // pred_region
      _
    $region17: #{torch_lstm_forward.1} parent=1 // pred_fallthru
      _
    // Predicated region
    $region18: #{torch_lstm_forward.1} parent=1 // pred_check
      _
    $region19: #{torch_lstm_forward.1} parent=1 // pred_check_branch
      %35 = sbr.rel (0) target = $region21
    $region20: #{torch_lstm_forward.1} parent=1 // pred_region
      _
    $region21: #{torch_lstm_forward.1} parent=1 // pred_fallthru
      _
    // Predicated region
    $region22: #{torch_lstm_forward.1} parent=1 // pred_check
      _
    $region23: #{torch_lstm_forward.1} parent=1 // pred_check_branch
      %37 = sbr.rel (0) target = $region25
    $region24: #{torch_lstm_forward.1} parent=1 // pred_region
      _
    $region25: #{torch_lstm_forward.1} parent=1 // pred_fallthru
      _
    // Predicated region
    $region26: #{torch_lstm_forward.1} parent=1 // pred_check
      _
    $region27: #{torch_lstm_forward.1} parent=1 // pred_check_branch
      %39 = sbr.rel (0) target = $region29
    $region28: #{torch_lstm_forward.1} parent=1 // pred_region
      _
    $region29: #{torch_lstm_forward.1} parent=1 // pred_fallthru
      _
    // Predicated region
    $region30: #{torch_lstm_forward.1} parent=1 // pred_check
      _
    $region31: #{torch_lstm_forward.1} parent=1 // pred_check_branch
      %41 = sbr.rel (0) target = $region33
    $region32: #{torch_lstm_forward.1} parent=1 // pred_region
      _
    $region33: #{torch_lstm_forward.1} parent=1 // pred_fallthru
      _
    // Predicated region
    $region34: #{torch_lstm_forward.1} parent=1 // pred_check
      _
    $region35: #{torch_lstm_forward.1} parent=1 // pred_check_branch
      %43 = sbr.rel (0) target = $region37
    $region36: #{torch_lstm_forward.1} parent=1 // pred_region
      %45 = dma.done [#allocation5], 16
    $region37: #{torch_lstm_forward.1} parent=1 // pred_fallthru
      _
    %46 = sfence
    %s47 = sld [smem:[#allocation3]]
    %v48 = vld [vmem:[%s2] sm:$0xff]
    %v49 = vld [vmem:[%s2 + $0x8] sm:$0xff]
    %v50 = vld [vmem:[%s2 + $0x10] sm:$0xff]
    %v51 = vld [vmem:[%s2 + $0x18] sm:$0xff]
    %vm52 = vcmask 261120
    %v54 = vsel %vm52, 0.0, 0
    %56 = vmatpush.msra.mxu0 0.0
    %57 = vmatpush.msra.mxu0 0.0
    %58 = vmatpush.msra.mxu0 0.0
    %59 = vmatpush.msra.mxu0 0.0
    %60 = vmatpush.msra.mxu0 0.0
    %61 = vmatpush.msra.mxu0 0.0
    %62 = vmatpush.msra.mxu0 0.0
    %63 = vmatpush.msra.mxu0 0.0
    %64 = vmatpush.msra.mxu0 0.0
    %65 = vmatpush.msra.mxu0 0.0
    %66 = vmatpush.msra.mxu0 0.0
    %67 = vmatpush.msra.mxu0 0.0
    %68 = vmatpush.msra.mxu0 %v51
    %69 = vmatpush.msra.mxu0 %v50
    %70 = vmatpush.msra.mxu0 %v49
    %71 = vmatpush.msra.mxu0 %v48
    %72 = vmatmul.f32.gmra.mxu0 %v54
    %v73 = vpop.f32.mrf.mxu0
    %v74 = vadd.f32 0.0, %v73
    %75 = vdwg.mxu0
    %v76 = vld [vmem:[%s4] sm:$0xff]
    %v77 = vld [vmem:[%s4 + $0x8] sm:$0xff]
    %v78 = vld [vmem:[%s4 + $0x10] sm:$0xff]
    %v79 = vld [vmem:[%s4 + $0x18] sm:$0xff]
    %v80 = vld [vmem:[%s5] sm:$0x1]
    %81 = vmatpush.msra.mxu0 0.0
    %82 = vmatpush.msra.mxu0 0.0
    %83 = vmatpush.msra.mxu0 0.0
    %84 = vmatpush.msra.mxu0 0.0
    %85 = vmatpush.msra.mxu0 0.0
    %86 = vmatpush.msra.mxu0 0.0
    %87 = vmatpush.msra.mxu0 0.0
    %88 = vmatpush.msra.mxu0 0.0
    %89 = vmatpush.msra.mxu0 0.0
    %90 = vmatpush.msra.mxu0 0.0
    %91 = vmatpush.msra.mxu0 0.0
    %92 = vmatpush.msra.mxu0 0.0
    %93 = vmatpush.msra.mxu0 %v79
    %94 = vmatpush.msra.mxu0 %v78
    %95 = vmatpush.msra.mxu0 %v77
    %96 = vmatpush.msra.mxu0 %v76
    %97 = vmatmul.f32.gmra.mxu0 %v54
    %v98 = vpop.f32.mrf.mxu0
    %v99 = vadd.f32 %v80, %v98
    %100 = vdwg.mxu0
    %s101 = scalar_lea.vmem %s1, %s47
    %v102 = vld [vmem:[%s101] sm:$0x1]
    %v103 = vadd.f32 %v102, %v74
    %v104 = vxor.u32 %v103, 2147483648
    %v105 = vmul.f32 %v104, 1.442695
    %v106 = vpow.pop %v105
    %v107 = vadd.f32 %v106, 1.0
    %v108 = vrcp.pop %v107
    %v109 = vmul.f32 %v107, %v108
    %v110 = vsub.f32 1.0, %v109
    %v111 = vmul.f32 %v108, %v110
    %v112 = vadd.f32 %v108, %v111
    %vm113 = vweird.f32 %v107
    %vm114 = vweird.f32 %v108
    %vm115 = vmor %vm113, %vm114
    %v116 = vsel %vm115, %v108, %v112
    %v117 = vand.u32 2147483647, %v107
    %vm118 = vcmp.eq.f32.partialorder %v117, 8.507059e+37
    %v119 = vand.u32 %v107, 2147483648
    %v120 = vor.u32 1.1754944e-38, %v119
    %v121 = vsel %vm118, %v120, %v116
    %v122 = vmul.f32 1.0, %v121
    %v123 = vmul.f32 %v122, 2.0
    %v124 = vsub.f32 %v123, 1.0
    %v125 = vmul.f32 %v122, 0.0
    %127 = vrot.lane.b32.xlu0 %v124, 64
    %v128 = vpop.permute.xlu0 %127
    %v130 = vmul.f32 %v122, %v128
    %132 = vrot.lane.b32.xlu0 %v130, 32
    %v133 = vpop.permute.xlu0 %132
    %v135 = vadd.f32 %v125, %v133
    %v136 = vtanh.pop %v135
    %138 = vrot.lane.b32.xlu0 %v136, 64
    %v139 = vpop.permute.xlu0 %138
    %v141 = vmul.f32 %v122, %v139
    %v142 = vld [vmem:[%s3] sm:$0xff]
    %v143 = vld [vmem:[%s3 + $0x8] sm:$0xff]
    %v144 = vld [vmem:[%s3 + $0x10] sm:$0xff]
    %v145 = vld [vmem:[%s3 + $0x18] sm:$0xff]
    %147 = vrot.lane.b32.xlu0 %v141, 32
    %v148 = vpop.permute.xlu0 %147
    %v149 = vsel %vm52, %v148, 0
    %151 = vmatpush.msra.mxu0 0.0
    %152 = vmatpush.msra.mxu0 0.0
    %153 = vmatpush.msra.mxu0 0.0
    %154 = vmatpush.msra.mxu0 0.0
    %155 = vmatpush.msra.mxu0 0.0
    %156 = vmatpush.msra.mxu0 0.0
    %157 = vmatpush.msra.mxu0 0.0
    %158 = vmatpush.msra.mxu0 0.0
    %159 = vmatpush.msra.mxu0 0.0
    %160 = vmatpush.msra.mxu0 0.0
    %161 = vmatpush.msra.mxu0 0.0
    %162 = vmatpush.msra.mxu0 0.0
    %163 = vmatpush.msra.mxu0 %v145
    %164 = vmatpush.msra.mxu0 %v144
    %165 = vmatpush.msra.mxu0 %v143
    %166 = vmatpush.msra.mxu0 %v142
    %167 = vmatmul.f32.gmra.mxu0 %v149
    %v168 = vpop.f32.mrf.mxu0
    %v169 = vadd.f32 %v99, %v168
    %170 = vdwg.mxu0
    %v171 = vxor.u32 %v169, 2147483648
    %v172 = vmul.f32 %v171, 1.442695
    %v173 = vpow.pop %v172
    %v174 = vadd.f32 %v173, 1.0
    %v175 = vrcp.pop %v174
    %v176 = vmul.f32 %v174, %v175
    %v177 = vsub.f32 1.0, %v176
    %v178 = vmul.f32 %v175, %v177
    %v179 = vadd.f32 %v175, %v178
    %vm180 = vweird.f32 %v174
    %vm181 = vweird.f32 %v175
    %vm182 = vmor %vm180, %vm181
    %v183 = vsel %vm182, %v175, %v179
    %v184 = vand.u32 2147483647, %v174
    %vm185 = vcmp.eq.f32.partialorder %v184, 8.507059e+37
    %v186 = vand.u32 %v174, 2147483648
    %v187 = vor.u32 1.1754944e-38, %v186
    %v188 = vsel %vm185, %v187, %v183
    %v189 = vmul.f32 1.0, %v188
    %v190 = vmul.f32 %v189, 2.0
    %v191 = vsub.f32 %v190, 1.0
    %v192 = vmul.f32 %v189, 0.0
    %194 = vrot.lane.b32.xlu0 %v191, 64
    %v195 = vpop.permute.xlu0 %194
    %v197 = vmul.f32 %v189, %v195
    %199 = vrot.lane.b32.xlu0 %v197, 32
    %v200 = vpop.permute.xlu0 %199
    %v202 = vadd.f32 %v192, %v200
    %v203 = vtanh.pop %v202
    %205 = vrot.lane.b32.xlu0 %v203, 64
    %v206 = vpop.permute.xlu0 %205
    %v208 = vmul.f32 %v189, %v206
    %210 = vrot.lane.b32.xlu0 %v208, 32
    %v211 = vpop.permute.xlu0 %210
    %vm213 = vcmask 253952
    %214 = vst.msk [vmem:[#allocation2] sm:$0x1] %vm213, %v211
    %s215 = sld [smem:[#allocation3 + $0x1]]
    %v216 = vld [vmem:[%s2] sm:$0xff]
    %v217 = vld [vmem:[%s2 + $0x8] sm:$0xff]
    %v218 = vld [vmem:[%s2 + $0x10] sm:$0xff]
    %v219 = vld [vmem:[%s2 + $0x18] sm:$0xff]
    %220 = vmatpush.msra.mxu0 0.0
    %221 = vmatpush.msra.mxu0 0.0
    %222 = vmatpush.msra.mxu0 0.0
    %223 = vmatpush.msra.mxu0 0.0
    %224 = vmatpush.msra.mxu0 0.0
    %225 = vmatpush.msra.mxu0 0.0
    %226 = vmatpush.msra.mxu0 0.0
    %227 = vmatpush.msra.mxu0 0.0
    %228 = vmatpush.msra.mxu0 0.0
    %229 = vmatpush.msra.mxu0 0.0
    %230 = vmatpush.msra.mxu0 0.0
    %231 = vmatpush.msra.mxu0 0.0
    %232 = vmatpush.msra.mxu0 %v219
    %233 = vmatpush.msra.mxu0 %v218
    %234 = vmatpush.msra.mxu0 %v217
    %235 = vmatpush.msra.mxu0 %v216
    %236 = vmatmul.f32.gmra.mxu0 %v149
    %v237 = vpop.f32.mrf.mxu0
    %v238 = vadd.f32 0.0, %v237
    %239 = vdwg.mxu0
    %v240 = vld [vmem:[%s4] sm:$0xff]
    %v241 = vld [vmem:[%s4 + $0x8] sm:$0xff]
    %v242 = vld [vmem:[%s4 + $0x10] sm:$0xff]
    %v243 = vld [vmem:[%s4 + $0x18] sm:$0xff]
    %v244 = vld [vmem:[%s5] sm:$0x1]
    %v245 = vsel %vm52, %v211, 0
    %247 = vmatpush.msra.mxu0 0.0
    %248 = vmatpush.msra.mxu0 0.0
    %249 = vmatpush.msra.mxu0 0.0
    %250 = vmatpush.msra.mxu0 0.0
    %251 = vmatpush.msra.mxu0 0.0
    %252 = vmatpush.msra.mxu0 0.0
    %253 = vmatpush.msra.mxu0 0.0
    %254 = vmatpush.msra.mxu0 0.0
    %255 = vmatpush.msra.mxu0 0.0
    %256 = vmatpush.msra.mxu0 0.0
    %257 = vmatpush.msra.mxu0 0.0
    %258 = vmatpush.msra.mxu0 0.0
    %259 = vmatpush.msra.mxu0 %v243
    %260 = vmatpush.msra.mxu0 %v242
    %261 = vmatpush.msra.mxu0 %v241
    %262 = vmatpush.msra.mxu0 %v240
    %263 = vmatmul.f32.gmra.mxu0 %v245
    %v264 = vpop.f32.mrf.mxu0
    %v265 = vadd.f32 %v244, %v264
    %266 = vdwg.mxu0
    %s267 = scalar_lea.vmem %s1, %s215
    %v268 = vld [vmem:[%s267] sm:$0x1]
    %v269 = vadd.f32 %v268, %v238
    %v270 = vxor.u32 %v269, 2147483648
    %v271 = vmul.f32 %v270, 1.442695
    %v272 = vpow.pop %v271
    %v273 = vadd.f32 %v272, 1.0
    %v274 = vrcp.pop %v273
    %v275 = vmul.f32 %v273, %v274
    %v276 = vsub.f32 1.0, %v275
    %v277 = vmul.f32 %v274, %v276
    %v278 = vadd.f32 %v274, %v277
    %vm279 = vweird.f32 %v273
    %vm280 = vweird.f32 %v274
    %vm281 = vmor %vm279, %vm280
    %v282 = vsel %vm281, %v274, %v278
    %v283 = vand.u32 2147483647, %v273
    %vm284 = vcmp.eq.f32.partialorder %v283, 8.507059e+37
    %v285 = vand.u32 %v273, 2147483648
    %v286 = vor.u32 1.1754944e-38, %v285
    %v287 = vsel %vm284, %v286, %v282
    %v288 = vmul.f32 1.0, %v287
    %v289 = vmul.f32 %v288, 2.0
    %v290 = vsub.f32 %v289, 1.0
    %v291 = vmul.f32 %v288, %v135
    %293 = vrot.lane.b32.xlu0 %v290, 64
    %v294 = vpop.permute.xlu0 %293
    %v296 = vmul.f32 %v288, %v294
    %298 = vrot.lane.b32.xlu0 %v296, 32
    %v299 = vpop.permute.xlu0 %298
    %v301 = vadd.f32 %v291, %v299
    %v302 = vtanh.pop %v301
    %304 = vrot.lane.b32.xlu0 %v302, 64
    %v305 = vpop.permute.xlu0 %304
    %v307 = vmul.f32 %v288, %v305
    %v308 = vld [vmem:[%s3] sm:$0xff]
    %v309 = vld [vmem:[%s3 + $0x8] sm:$0xff]
    %v310 = vld [vmem:[%s3 + $0x10] sm:$0xff]
    %v311 = vld [vmem:[%s3 + $0x18] sm:$0xff]
    %313 = vrot.lane.b32.xlu0 %v307, 32
    %v314 = vpop.permute.xlu0 %313
    %v315 = vsel %vm52, %v314, 0
    %317 = vmatpush.msra.mxu0 0.0
    %318 = vmatpush.msra.mxu0 0.0
    %319 = vmatpush.msra.mxu0 0.0
    %320 = vmatpush.msra.mxu0 0.0
    %321 = vmatpush.msra.mxu0 0.0
    %322 = vmatpush.msra.mxu0 0.0
    %323 = vmatpush.msra.mxu0 0.0
    %324 = vmatpush.msra.mxu0 0.0
    %325 = vmatpush.msra.mxu0 0.0
    %326 = vmatpush.msra.mxu0 0.0
    %327 = vmatpush.msra.mxu0 0.0
    %328 = vmatpush.msra.mxu0 0.0
    %329 = vmatpush.msra.mxu0 %v311
    %330 = vmatpush.msra.mxu0 %v310
    %331 = vmatpush.msra.mxu0 %v309
    %332 = vmatpush.msra.mxu0 %v308
    %333 = vmatmul.f32.gmra.mxu0 %v315
    %v334 = vpop.f32.mrf.mxu0
    %v335 = vadd.f32 %v265, %v334
    %336 = vdwg.mxu0
    %v337 = vxor.u32 %v335, 2147483648
    %v338 = vmul.f32 %v337, 1.442695
    %v339 = vpow.pop %v338
    %v340 = vadd.f32 %v339, 1.0
    %v341 = vrcp.pop %v340
    %v342 = vmul.f32 %v340, %v341
    %v343 = vsub.f32 1.0, %v342
    %v344 = vmul.f32 %v341, %v343
    %v345 = vadd.f32 %v341, %v344
    %vm346 = vweird.f32 %v340
    %vm347 = vweird.f32 %v341
    %vm348 = vmor %vm346, %vm347
    %v349 = vsel %vm348, %v341, %v345
    %v350 = vand.u32 2147483647, %v340
    %vm351 = vcmp.eq.f32.partialorder %v350, 8.507059e+37
    %v352 = vand.u32 %v340, 2147483648
    %v353 = vor.u32 1.1754944e-38, %v352
    %v354 = vsel %vm351, %v353, %v349
    %v355 = vmul.f32 1.0, %v354
    %v356 = vmul.f32 %v355, 2.0
    %v357 = vsub.f32 %v356, 1.0
    %v358 = vmul.f32 %v355, %v202
    %360 = vrot.lane.b32.xlu0 %v357, 64
    %v361 = vpop.permute.xlu0 %360
    %v363 = vmul.f32 %v355, %v361
    %365 = vrot.lane.b32.xlu0 %v363, 32
    %v366 = vpop.permute.xlu0 %365
    %v368 = vadd.f32 %v358, %v366
    %v369 = vtanh.pop %v368
    %371 = vrot.lane.b32.xlu0 %v369, 64
    %v372 = vpop.permute.xlu0 %371
    %v374 = vmul.f32 %v355, %v372
    %376 = vrot.lane.b32.xlu0 %v374, 32
    %v377 = vpop.permute.xlu0 %376
    %379 = vst.msk [vmem:[#allocation2 + $0x1] sm:$0x1] %vm213, %v377
    %s380 = sld [smem:[#allocation3 + $0x2]]
    %v381 = vld [vmem:[%s2] sm:$0xff]
    %v382 = vld [vmem:[%s2 + $0x8] sm:$0xff]
    %v383 = vld [vmem:[%s2 + $0x10] sm:$0xff]
    %v384 = vld [vmem:[%s2 + $0x18] sm:$0xff]
    %385 = vmatpush.msra.mxu0 0.0
    %386 = vmatpush.msra.mxu0 0.0
    %387 = vmatpush.msra.mxu0 0.0
    %388 = vmatpush.msra.mxu0 0.0
    %389 = vmatpush.msra.mxu0 0.0
    %390 = vmatpush.msra.mxu0 0.0
    %391 = vmatpush.msra.mxu0 0.0
    %392 = vmatpush.msra.mxu0 0.0
    %393 = vmatpush.msra.mxu0 0.0
    %394 = vmatpush.msra.mxu0 0.0
    %395 = vmatpush.msra.mxu0 0.0
    %396 = vmatpush.msra.mxu0 0.0
    %397 = vmatpush.msra.mxu0 %v384
    %398 = vmatpush.msra.mxu0 %v383
    %399 = vmatpush.msra.mxu0 %v382
    %400 = vmatpush.msra.mxu0 %v381
    %401 = vmatmul.f32.gmra.mxu0 %v315
    %v402 = vpop.f32.mrf.mxu0
    %v403 = vadd.f32 0.0, %v402
    %404 = vdwg.mxu0
    %v405 = vld [vmem:[%s4] sm:$0xff]
    %v406 = vld [vmem:[%s4 + $0x8] sm:$0xff]
    %v407 = vld [vmem:[%s4 + $0x10] sm:$0xff]
    %v408 = vld [vmem:[%s4 + $0x18] sm:$0xff]
    %v409 = vld [vmem:[%s5] sm:$0x1]
    %v410 = vsel %vm52, %v377, 0
    %412 = vmatpush.msra.mxu0 0.0
    %413 = vmatpush.msra.mxu0 0.0
    %414 = vmatpush.msra.mxu0 0.0
    %415 = vmatpush.msra.mxu0 0.0
    %416 = vmatpush.msra.mxu0 0.0
    %417 = vmatpush.msra.mxu0 0.0
    %418 = vmatpush.msra.mxu0 0.0
    %419 = vmatpush.msra.mxu0 0.0
    %420 = vmatpush.msra.mxu0 0.0
    %421 = vmatpush.msra.mxu0 0.0
    %422 = vmatpush.msra.mxu0 0.0
    %423 = vmatpush.msra.mxu0 0.0
    %424 = vmatpush.msra.mxu0 %v408
    %425 = vmatpush.msra.mxu0 %v407
    %426 = vmatpush.msra.mxu0 %v406
    %427 = vmatpush.msra.mxu0 %v405
    %428 = vmatmul.f32.gmra.mxu0 %v410
    %v429 = vpop.f32.mrf.mxu0
    %v430 = vadd.f32 %v409, %v429
    %431 = vdwg.mxu0
    %s432 = scalar_lea.vmem %s1, %s380
    %v433 = vld [vmem:[%s432] sm:$0x1]
    %v434 = vadd.f32 %v433, %v403
    %v435 = vxor.u32 %v434, 2147483648
    %v436 = vmul.f32 %v435, 1.442695
    %v437 = vpow.pop %v436
    %v438 = vadd.f32 %v437, 1.0
    %v439 = vrcp.pop %v438
    %v440 = vmul.f32 %v438, %v439
    %v441 = vsub.f32 1.0, %v440
    %v442 = vmul.f32 %v439, %v441
    %v443 = vadd.f32 %v439, %v442
    %vm444 = vweird.f32 %v438
    %vm445 = vweird.f32 %v439
    %vm446 = vmor %vm444, %vm445
    %v447 = vsel %vm446, %v439, %v443
    %v448 = vand.u32 2147483647, %v438
    %vm449 = vcmp.eq.f32.partialorder %v448, 8.507059e+37
    %v450 = vand.u32 %v438, 2147483648
    %v451 = vor.u32 1.1754944e-38, %v450
    %v452 = vsel %vm449, %v451, %v447
    %v453 = vmul.f32 1.0, %v452
    %v454 = vmul.f32 %v453, 2.0
    %v455 = vsub.f32 %v454, 1.0
    %v456 = vmul.f32 %v453, %v301
    %458 = vrot.lane.b32.xlu0 %v455, 64
    %v459 = vpop.permute.xlu0 %458
    %v461 = vmul.f32 %v453, %v459
    %463 = vrot.lane.b32.xlu0 %v461, 32
    %v464 = vpop.permute.xlu0 %463
    %v466 = vadd.f32 %v456, %v464
    %v467 = vtanh.pop %v466
    %469 = vrot.lane.b32.xlu0 %v467, 64
    %v470 = vpop.permute.xlu0 %469
    %v472 = vmul.f32 %v453, %v470
    %v473 = vld [vmem:[%s3] sm:$0xff]
    %v474 = vld [vmem:[%s3 + $0x8] sm:$0xff]
    %v475 = vld [vmem:[%s3 + $0x10] sm:$0xff]
    %v476 = vld [vmem:[%s3 + $0x18] sm:$0xff]
    %478 = vrot.lane.b32.xlu0 %v472, 32
    %v479 = vpop.permute.xlu0 %478
    %v480 = vsel %vm52, %v479, 0
    %482 = vmatpush.msra.mxu0 0.0
    %483 = vmatpush.msra.mxu0 0.0
    %484 = vmatpush.msra.mxu0 0.0
    %485 = vmatpush.msra.mxu0 0.0
    %486 = vmatpush.msra.mxu0 0.0
    %487 = vmatpush.msra.mxu0 0.0
    %488 = vmatpush.msra.mxu0 0.0
    %489 = vmatpush.msra.mxu0 0.0
    %490 = vmatpush.msra.mxu0 0.0
    %491 = vmatpush.msra.mxu0 0.0
    %492 = vmatpush.msra.mxu0 0.0
    %493 = vmatpush.msra.mxu0 0.0
    %494 = vmatpush.msra.mxu0 %v476
    %495 = vmatpush.msra.mxu0 %v475
    %496 = vmatpush.msra.mxu0 %v474
    %497 = vmatpush.msra.mxu0 %v473
    %498 = vmatmul.f32.gmra.mxu0 %v480
    %v499 = vpop.f32.mrf.mxu0
    %v500 = vadd.f32 %v430, %v499
    %501 = vdwg.mxu0
    %v502 = vxor.u32 %v500, 2147483648
    %v503 = vmul.f32 %v502, 1.442695
    %v504 = vpow.pop %v503
    %v505 = vadd.f32 %v504, 1.0
    %v506 = vrcp.pop %v505
    %v507 = vmul.f32 %v505, %v506
    %v508 = vsub.f32 1.0, %v507
    %v509 = vmul.f32 %v506, %v508
    %v510 = vadd.f32 %v506, %v509
    %vm511 = vweird.f32 %v505
    %vm512 = vweird.f32 %v506
    %vm513 = vmor %vm511, %vm512
    %v514 = vsel %vm513, %v506, %v510
    %v515 = vand.u32 2147483647, %v505
    %vm516 = vcmp.eq.f32.partialorder %v515, 8.507059e+37
    %v517 = vand.u32 %v505, 2147483648
    %v518 = vor.u32 1.1754944e-38, %v517
    %v519 = vsel %vm516, %v518, %v514
    %v520 = vmul.f32 1.0, %v519
    %v521 = vmul.f32 %v520, 2.0
    %v522 = vsub.f32 %v521, 1.0
    %v523 = vmul.f32 %v520, %v368
    %525 = vrot.lane.b32.xlu0 %v522, 64
    %v526 = vpop.permute.xlu0 %525
    %v528 = vmul.f32 %v520, %v526
    %530 = vrot.lane.b32.xlu0 %v528, 32
    %v531 = vpop.permute.xlu0 %530
    %v533 = vadd.f32 %v523, %v531
    %v534 = vtanh.pop %v533
    %536 = vrot.lane.b32.xlu0 %v534, 64
    %v537 = vpop.permute.xlu0 %536
    %v539 = vmul.f32 %v520, %v537
    %541 = vrot.lane.b32.xlu0 %v539, 32
    %v542 = vpop.permute.xlu0 %541
    %544 = vst.msk [vmem:[#allocation2 + $0x2] sm:$0x1] %vm213, %v542
    %s545 = sld [smem:[#allocation3 + $0x3]]
    %v546 = vld [vmem:[%s2] sm:$0xff]
    %v547 = vld [vmem:[%s2 + $0x8] sm:$0xff]
    %v548 = vld [vmem:[%s2 + $0x10] sm:$0xff]
    %v549 = vld [vmem:[%s2 + $0x18] sm:$0xff]
    %550 = vmatpush.msra.mxu0 0.0
    %551 = vmatpush.msra.mxu0 0.0
    %552 = vmatpush.msra.mxu0 0.0
    %553 = vmatpush.msra.mxu0 0.0
    %554 = vmatpush.msra.mxu0 0.0
    %555 = vmatpush.msra.mxu0 0.0
    %556 = vmatpush.msra.mxu0 0.0
    %557 = vmatpush.msra.mxu0 0.0
    %558 = vmatpush.msra.mxu0 0.0
    %559 = vmatpush.msra.mxu0 0.0
    %560 = vmatpush.msra.mxu0 0.0
    %561 = vmatpush.msra.mxu0 0.0
    %562 = vmatpush.msra.mxu0 %v549
    %563 = vmatpush.msra.mxu0 %v548
    %564 = vmatpush.msra.mxu0 %v547
    %565 = vmatpush.msra.mxu0 %v546
    %566 = vmatmul.f32.gmra.mxu0 %v480
    %v567 = vpop.f32.mrf.mxu0
    %v568 = vadd.f32 0.0, %v567
    %569 = vdwg.mxu0
    %v570 = vld [vmem:[%s4] sm:$0xff]
    %v571 = vld [vmem:[%s4 + $0x8] sm:$0xff]
    %v572 = vld [vmem:[%s4 + $0x10] sm:$0xff]
    %v573 = vld [vmem:[%s4 + $0x18] sm:$0xff]
    %v574 = vld [vmem:[%s5] sm:$0x1]
    %v575 = vsel %vm52, %v542, 0
    %577 = vmatpush.msra.mxu0 0.0
    %578 = vmatpush.msra.mxu0 0.0
    %579 = vmatpush.msra.mxu0 0.0
    %580 = vmatpush.msra.mxu0 0.0
    %581 = vmatpush.msra.mxu0 0.0
    %582 = vmatpush.msra.mxu0 0.0
    %583 = vmatpush.msra.mxu0 0.0
    %584 = vmatpush.msra.mxu0 0.0
    %585 = vmatpush.msra.mxu0 0.0
    %586 = vmatpush.msra.mxu0 0.0
    %587 = vmatpush.msra.mxu0 0.0
    %588 = vmatpush.msra.mxu0 0.0
    %589 = vmatpush.msra.mxu0 %v573
    %590 = vmatpush.msra.mxu0 %v572
    %591 = vmatpush.msra.mxu0 %v571
    %592 = vmatpush.msra.mxu0 %v570
    %593 = vmatmul.f32.gmra.mxu0 %v575
    %v594 = vpop.f32.mrf.mxu0
    %v595 = vadd.f32 %v574, %v594
    %596 = vdwg.mxu0
    %s597 = scalar_lea.vmem %s1, %s545
    %v598 = vld [vmem:[%s597] sm:$0x1]
    %v599 = vadd.f32 %v598, %v568
    %v600 = vxor.u32 %v599, 2147483648
    %v601 = vmul.f32 %v600, 1.442695
    %v602 = vpow.pop %v601
    %v603 = vadd.f32 %v602, 1.0
    %v604 = vrcp.pop %v603
    %v605 = vmul.f32 %v603, %v604
    %v606 = vsub.f32 1.0, %v605
    %v607 = vmul.f32 %v604, %v606
    %v608 = vadd.f32 %v604, %v607
    %vm609 = vweird.f32 %v603
    %vm610 = vweird.f32 %v604
    %vm611 = vmor %vm609, %vm610
    %v612 = vsel %vm611, %v604, %v608
    %v613 = vand.u32 2147483647, %v603
    %vm614 = vcmp.eq.f32.partialorder %v613, 8.507059e+37
    %v615 = vand.u32 %v603, 2147483648
    %v616 = vor.u32 1.1754944e-38, %v615
    %v617 = vsel %vm614, %v616, %v612
    %v618 = vmul.f32 1.0, %v617
    %v619 = vmul.f32 %v618, 2.0
    %v620 = vsub.f32 %v619, 1.0
    %v621 = vmul.f32 %v618, %v466
    %623 = vrot.lane.b32.xlu0 %v620, 64
    %v624 = vpop.permute.xlu0 %623
    %v626 = vmul.f32 %v618, %v624
    %628 = vrot.lane.b32.xlu0 %v626, 32
    %v629 = vpop.permute.xlu0 %628
    %v631 = vadd.f32 %v621, %v629
    %v632 = vtanh.pop %v631
    %634 = vrot.lane.b32.xlu0 %v632, 64
    %v635 = vpop.permute.xlu0 %634
    %v637 = vmul.f32 %v618, %v635
    %v638 = vld [vmem:[%s3] sm:$0xff]
    %v639 = vld [vmem:[%s3 + $0x8] sm:$0xff]
    %v640 = vld [vmem:[%s3 + $0x10] sm:$0xff]
    %v641 = vld [vmem:[%s3 + $0x18] sm:$0xff]
    %643 = vrot.lane.b32.xlu0 %v637, 32
    %v644 = vpop.permute.xlu0 %643
    %v645 = vsel %vm52, %v644, 0
    %647 = vmatpush.msra.mxu0 0.0
    %648 = vmatpush.msra.mxu0 0.0
    %649 = vmatpush.msra.mxu0 0.0
    %650 = vmatpush.msra.mxu0 0.0
    %651 = vmatpush.msra.mxu0 0.0
    %652 = vmatpush.msra.mxu0 0.0
    %653 = vmatpush.msra.mxu0 0.0
    %654 = vmatpush.msra.mxu0 0.0
    %655 = vmatpush.msra.mxu0 0.0
    %656 = vmatpush.msra.mxu0 0.0
    %657 = vmatpush.msra.mxu0 0.0
    %658 = vmatpush.msra.mxu0 0.0
    %659 = vmatpush.msra.mxu0 %v641
    %660 = vmatpush.msra.mxu0 %v640
    %661 = vmatpush.msra.mxu0 %v639
    %662 = vmatpush.msra.mxu0 %v638
    %663 = vmatmul.f32.gmra.mxu0 %v645
    %v664 = vpop.f32.mrf.mxu0
    %v665 = vadd.f32 %v595, %v664
    %666 = vdwg.mxu0
    %v667 = vxor.u32 %v665, 2147483648
    %v668 = vmul.f32 %v667, 1.442695
    %v669 = vpow.pop %v668
    %v670 = vadd.f32 %v669, 1.0
    %v671 = vrcp.pop %v670
    %v672 = vmul.f32 %v670, %v671
    %v673 = vsub.f32 1.0, %v672
    %v674 = vmul.f32 %v671, %v673
    %v675 = vadd.f32 %v671, %v674
    %vm676 = vweird.f32 %v670
    %vm677 = vweird.f32 %v671
    %vm678 = vmor %vm676, %vm677
    %v679 = vsel %vm678, %v671, %v675
    %v680 = vand.u32 2147483647, %v670
    %vm681 = vcmp.eq.f32.partialorder %v680, 8.507059e+37
    %v682 = vand.u32 %v670, 2147483648
    %v683 = vor.u32 1.1754944e-38, %v682
    %v684 = vsel %vm681, %v683, %v679
    %v685 = vmul.f32 1.0, %v684
    %v686 = vmul.f32 %v685, 2.0
    %v687 = vsub.f32 %v686, 1.0
    %v688 = vmul.f32 %v685, %v533
    %690 = vrot.lane.b32.xlu0 %v687, 64
    %v691 = vpop.permute.xlu0 %690
    %v693 = vmul.f32 %v685, %v691
    %695 = vrot.lane.b32.xlu0 %v693, 32
    %v696 = vpop.permute.xlu0 %695
    %v698 = vadd.f32 %v688, %v696
    %v699 = vtanh.pop %v698
    %701 = vrot.lane.b32.xlu0 %v699, 64
    %v702 = vpop.permute.xlu0 %701
    %v704 = vmul.f32 %v685, %v702
    %706 = vrot.lane.b32.xlu0 %v704, 32
    %v707 = vpop.permute.xlu0 %706
    %709 = vst.msk [vmem:[#allocation2 + $0x3] sm:$0x1] %vm213, %v707
    %s710 = sld [smem:[#allocation3 + $0x4]]
    %v711 = vld [vmem:[%s2] sm:$0xff]
    %v712 = vld [vmem:[%s2 + $0x8] sm:$0xff]
    %v713 = vld [vmem:[%s2 + $0x10] sm:$0xff]
    %v714 = vld [vmem:[%s2 + $0x18] sm:$0xff]
    %715 = vmatpush.msra.mxu0 0.0
    %716 = vmatpush.msra.mxu0 0.0
    %717 = vmatpush.msra.mxu0 0.0
    %718 = vmatpush.msra.mxu0 0.0
    %719 = vmatpush.msra.mxu0 0.0
    %720 = vmatpush.msra.mxu0 0.0
    %721 = vmatpush.msra.mxu0 0.0
    %722 = vmatpush.msra.mxu0 0.0
    %723 = vmatpush.msra.mxu0 0.0
    %724 = vmatpush.msra.mxu0 0.0
    %725 = vmatpush.msra.mxu0 0.0
    %726 = vmatpush.msra.mxu0 0.0
    %727 = vmatpush.msra.mxu0 %v714
    %728 = vmatpush.msra.mxu0 %v713
    %729 = vmatpush.msra.mxu0 %v712
    %730 = vmatpush.msra.mxu0 %v711
    %731 = vmatmul.f32.gmra.mxu0 %v645
    %v732 = vpop.f32.mrf.mxu0
    %v733 = vadd.f32 0.0, %v732
    %734 = vdwg.mxu0
    %v735 = vld [vmem:[%s4] sm:$0xff]
    %v736 = vld [vmem:[%s4 + $0x8] sm:$0xff]
    %v737 = vld [vmem:[%s4 + $0x10] sm:$0xff]
    %v738 = vld [vmem:[%s4 + $0x18] sm:$0xff]
    %v739 = vld [vmem:[%s5] sm:$0x1]
    %v740 = vsel %vm52, %v707, 0
    %742 = vmatpush.msra.mxu0 0.0
    %743 = vmatpush.msra.mxu0 0.0
    %744 = vmatpush.msra.mxu0 0.0
    %745 = vmatpush.msra.mxu0 0.0
    %746 = vmatpush.msra.mxu0 0.0
    %747 = vmatpush.msra.mxu0 0.0
    %748 = vmatpush.msra.mxu0 0.0
    %749 = vmatpush.msra.mxu0 0.0
    %750 = vmatpush.msra.mxu0 0.0
    %751 = vmatpush.msra.mxu0 0.0
    %752 = vmatpush.msra.mxu0 0.0
    %753 = vmatpush.msra.mxu0 0.0
    %754 = vmatpush.msra.mxu0 %v738
    %755 = vmatpush.msra.mxu0 %v737
    %756 = vmatpush.msra.mxu0 %v736
    %757 = vmatpush.msra.mxu0 %v735
    %758 = vmatmul.f32.gmra.mxu0 %v740
    %v759 = vpop.f32.mrf.mxu0
    %v760 = vadd.f32 %v739, %v759
    %761 = vdwg.mxu0
    %s762 = scalar_lea.vmem %s1, %s710
    %v763 = vld [vmem:[%s762] sm:$0x1]
    %v764 = vadd.f32 %v763, %v733
    %v765 = vxor.u32 %v764, 2147483648
    %v766 = vmul.f32 %v765, 1.442695
    %v767 = vpow.pop %v766
    %v768 = vadd.f32 %v767, 1.0
    %v769 = vrcp.pop %v768
    %v770 = vmul.f32 %v768, %v769
    %v771 = vsub.f32 1.0, %v770
    %v772 = vmul.f32 %v769, %v771
    %v773 = vadd.f32 %v769, %v772
    %vm774 = vweird.f32 %v768
    %vm775 = vweird.f32 %v769
    %vm776 = vmor %vm774, %vm775
    %v777 = vsel %vm776, %v769, %v773
    %v778 = vand.u32 2147483647, %v768
    %vm779 = vcmp.eq.f32.partialorder %v778, 8.507059e+37
    %v780 = vand.u32 %v768, 2147483648
    %v781 = vor.u32 1.1754944e-38, %v780
    %v782 = vsel %vm779, %v781, %v777
    %v783 = vmul.f32 1.0, %v782
    %v784 = vmul.f32 %v783, 2.0
    %v785 = vsub.f32 %v784, 1.0
    %v786 = vmul.f32 %v783, %v631
    %788 = vrot.lane.b32.xlu0 %v785, 64
    %v789 = vpop.permute.xlu0 %788
    %v791 = vmul.f32 %v783, %v789
    %793 = vrot.lane.b32.xlu0 %v791, 32
    %v794 = vpop.permute.xlu0 %793
    %v796 = vadd.f32 %v786, %v794
    %v797 = vtanh.pop %v796
    %799 = vrot.lane.b32.xlu0 %v797, 64
    %v800 = vpop.permute.xlu0 %799
    %v802 = vmul.f32 %v783, %v800
    %v803 = vld [vmem:[%s3] sm:$0xff]
    %v804 = vld [vmem:[%s3 + $0x8] sm:$0xff]
    %v805 = vld [vmem:[%s3 + $0x10] sm:$0xff]
    %v806 = vld [vmem:[%s3 + $0x18] sm:$0xff]
    %808 = vrot.lane.b32.xlu0 %v802, 32
    %v809 = vpop.permute.xlu0 %808
    %v810 = vsel %vm52, %v809, 0
    %812 = vmatpush.msra.mxu0 0.0
    %813 = vmatpush.msra.mxu0 0.0
    %814 = vmatpush.msra.mxu0 0.0
    %815 = vmatpush.msra.mxu0 0.0
    %816 = vmatpush.msra.mxu0 0.0
    %817 = vmatpush.msra.mxu0 0.0
    %818 = vmatpush.msra.mxu0 0.0
    %819 = vmatpush.msra.mxu0 0.0
    %820 = vmatpush.msra.mxu0 0.0
    %821 = vmatpush.msra.mxu0 0.0
    %822 = vmatpush.msra.mxu0 0.0
    %823 = vmatpush.msra.mxu0 0.0
    %824 = vmatpush.msra.mxu0 %v806
    %825 = vmatpush.msra.mxu0 %v805
    %826 = vmatpush.msra.mxu0 %v804
    %827 = vmatpush.msra.mxu0 %v803
    %828 = vmatmul.f32.gmra.mxu0 %v810
    %v829 = vpop.f32.mrf.mxu0
    %v830 = vadd.f32 %v760, %v829
    %831 = vdwg.mxu0
    %v832 = vxor.u32 %v830, 2147483648
    %v833 = vmul.f32 %v832, 1.442695
    %v834 = vpow.pop %v833
    %v835 = vadd.f32 %v834, 1.0
    %v836 = vrcp.pop %v835
    %v837 = vmul.f32 %v835, %v836
    %v838 = vsub.f32 1.0, %v837
    %v839 = vmul.f32 %v836, %v838
    %v840 = vadd.f32 %v836, %v839
    %vm841 = vweird.f32 %v835
    %vm842 = vweird.f32 %v836
    %vm843 = vmor %vm841, %vm842
    %v844 = vsel %vm843, %v836, %v840
    %v845 = vand.u32 2147483647, %v835
    %vm846 = vcmp.eq.f32.partialorder %v845, 8.507059e+37
    %v847 = vand.u32 %v835, 2147483648
    %v848 = vor.u32 1.1754944e-38, %v847
    %v849 = vsel %vm846, %v848, %v844
    %v850 = vmul.f32 1.0, %v849
    %v851 = vmul.f32 %v850, 2.0
    %v852 = vsub.f32 %v851, 1.0
    %v853 = vmul.f32 %v850, %v698
    %855 = vrot.lane.b32.xlu0 %v852, 64
    %v856 = vpop.permute.xlu0 %855
    %v858 = vmul.f32 %v850, %v856
    %860 = vrot.lane.b32.xlu0 %v858, 32
    %v861 = vpop.permute.xlu0 %860
    %v863 = vadd.f32 %v853, %v861
    %v864 = vtanh.pop %v863
    %866 = vrot.lane.b32.xlu0 %v864, 64
    %v867 = vpop.permute.xlu0 %866
    %v869 = vmul.f32 %v850, %v867
    %871 = vrot.lane.b32.xlu0 %v869, 32
    %v872 = vpop.permute.xlu0 %871
    %874 = vst.msk [vmem:[#allocation2 + $0x4] sm:$0x1] %vm213, %v872
    %s875 = sld [smem:[#allocation3 + $0x5]]
    %v876 = vld [vmem:[%s2] sm:$0xff]
    %v877 = vld [vmem:[%s2 + $0x8] sm:$0xff]
    %v878 = vld [vmem:[%s2 + $0x10] sm:$0xff]
    %v879 = vld [vmem:[%s2 + $0x18] sm:$0xff]
    %880 = vmatpush.msra.mxu0 0.0
    %881 = vmatpush.msra.mxu0 0.0
    %882 = vmatpush.msra.mxu0 0.0
    %883 = vmatpush.msra.mxu0 0.0
    %884 = vmatpush.msra.mxu0 0.0
    %885 = vmatpush.msra.mxu0 0.0
    %886 = vmatpush.msra.mxu0 0.0
    %887 = vmatpush.msra.mxu0 0.0
    %888 = vmatpush.msra.mxu0 0.0
    %889 = vmatpush.msra.mxu0 0.0
    %890 = vmatpush.msra.mxu0 0.0
    %891 = vmatpush.msra.mxu0 0.0
    %892 = vmatpush.msra.mxu0 %v879
    %893 = vmatpush.msra.mxu0 %v878
    %894 = vmatpush.msra.mxu0 %v877
    %895 = vmatpush.msra.mxu0 %v876
    %896 = vmatmul.f32.gmra.mxu0 %v810
    %v897 = vpop.f32.mrf.mxu0
    %v898 = vadd.f32 0.0, %v897
    %899 = vdwg.mxu0
    %v900 = vld [vmem:[%s4] sm:$0xff]
    %v901 = vld [vmem:[%s4 + $0x8] sm:$0xff]
    %v902 = vld [vmem:[%s4 + $0x10] sm:$0xff]
    %v903 = vld [vmem:[%s4 + $0x18] sm:$0xff]
    %v904 = vld [vmem:[%s5] sm:$0x1]
    %v905 = vsel %vm52, %v872, 0
    %907 = vmatpush.msra.mxu0 0.0
    %908 = vmatpush.msra.mxu0 0.0
    %909 = vmatpush.msra.mxu0 0.0
    %910 = vmatpush.msra.mxu0 0.0
    %911 = vmatpush.msra.mxu0 0.0
    %912 = vmatpush.msra.mxu0 0.0
    %913 = vmatpush.msra.mxu0 0.0
    %914 = vmatpush.msra.mxu0 0.0
    %915 = vmatpush.msra.mxu0 0.0
    %916 = vmatpush.msra.mxu0 0.0
    %917 = vmatpush.msra.mxu0 0.0
    %918 = vmatpush.msra.mxu0 0.0
    %919 = vmatpush.msra.mxu0 %v903
    %920 = vmatpush.msra.mxu0 %v902
    %921 = vmatpush.msra.mxu0 %v901
    %922 = vmatpush.msra.mxu0 %v900
    %923 = vmatmul.f32.gmra.mxu0 %v905
    %v924 = vpop.f32.mrf.mxu0
    %v925 = vadd.f32 %v904, %v924
    %926 = vdwg.mxu0
    %s927 = scalar_lea.vmem %s1, %s875
    %v928 = vld [vmem:[%s927] sm:$0x1]
    %v929 = vadd.f32 %v928, %v898
    %v930 = vxor.u32 %v929, 2147483648
    %v931 = vmul.f32 %v930, 1.442695
    %v932 = vpow.pop %v931
    %v933 = vadd.f32 %v932, 1.0
    %v934 = vrcp.pop %v933
    %v935 = vmul.f32 %v933, %v934
    %v936 = vsub.f32 1.0, %v935
    %v937 = vmul.f32 %v934, %v936
    %v938 = vadd.f32 %v934, %v937
    %vm939 = vweird.f32 %v933
    %vm940 = vweird.f32 %v934
    %vm941 = vmor %vm939, %vm940
    %v942 = vsel %vm941, %v934, %v938
    %v943 = vand.u32 2147483647, %v933
    %vm944 = vcmp.eq.f32.partialorder %v943, 8.507059e+37
    %v945 = vand.u32 %v933, 2147483648
    %v946 = vor.u32 1.1754944e-38, %v945
    %v947 = vsel %vm944, %v946, %v942
    %v948 = vmul.f32 1.0, %v947
    %v949 = vmul.f32 %v948, 2.0
    %v950 = vsub.f32 %v949, 1.0
    %v951 = vmul.f32 %v948, %v796
    %953 = vrot.lane.b32.xlu0 %v950, 64
    %v954 = vpop.permute.xlu0 %953
    %v956 = vmul.f32 %v948, %v954
    %958 = vrot.lane.b32.xlu0 %v956, 32
    %v959 = vpop.permute.xlu0 %958
    %v961 = vadd.f32 %v951, %v959
    %v962 = vtanh.pop %v961
    %964 = vrot.lane.b32.xlu0 %v962, 64
    %v965 = vpop.permute.xlu0 %964
    %v967 = vmul.f32 %v948, %v965
    %v968 = vld [vmem:[%s3] sm:$0xff]
    %v969 = vld [vmem:[%s3 + $0x8] sm:$0xff]
    %v970 = vld [vmem:[%s3 + $0x10] sm:$0xff]
    %v971 = vld [vmem:[%s3 + $0x18] sm:$0xff]
    %973 = vrot.lane.b32.xlu0 %v967, 32
    %v974 = vpop.permute.xlu0 %973
    %v975 = vsel %vm52, %v974, 0
    %977 = vmatpush.msra.mxu0 0.0
    %978 = vmatpush.msra.mxu0 0.0
    %979 = vmatpush.msra.mxu0 0.0
    %980 = vmatpush.msra.mxu0 0.0
    %981 = vmatpush.msra.mxu0 0.0
    %982 = vmatpush.msra.mxu0 0.0
    %983 = vmatpush.msra.mxu0 0.0
    %984 = vmatpush.msra.mxu0 0.0
    %985 = vmatpush.msra.mxu0 0.0
    %986 = vmatpush.msra.mxu0 0.0
    %987 = vmatpush.msra.mxu0 0.0
    %988 = vmatpush.msra.mxu0 0.0
    %989 = vmatpush.msra.mxu0 %v971
    %990 = vmatpush.msra.mxu0 %v970
    %991 = vmatpush.msra.mxu0 %v969
    %992 = vmatpush.msra.mxu0 %v968
    %993 = vmatmul.f32.gmra.mxu0 %v975
    %v994 = vpop.f32.mrf.mxu0
    %v995 = vadd.f32 %v925, %v994
    %996 = vdwg.mxu0
    %v997 = vxor.u32 %v995, 2147483648
    %v998 = vmul.f32 %v997, 1.442695
    %v999 = vpow.pop %v998
    %v1000 = vadd.f32 %v999, 1.0
    %v1001 = vrcp.pop %v1000
    %v1002 = vmul.f32 %v1000, %v1001
    %v1003 = vsub.f32 1.0, %v1002
    %v1004 = vmul.f32 %v1001, %v1003
    %v1005 = vadd.f32 %v1001, %v1004
    %vm1006 = vweird.f32 %v1000
    %vm1007 = vweird.f32 %v1001
    %vm1008 = vmor %vm1006, %vm1007
    %v1009 = vsel %vm1008, %v1001, %v1005
    %v1010 = vand.u32 2147483647, %v1000
    %vm1011 = vcmp.eq.f32.partialorder %v1010, 8.507059e+37
    %v1012 = vand.u32 %v1000, 2147483648
    %v1013 = vor.u32 1.1754944e-38, %v1012
    %v1014 = vsel %vm1011, %v1013, %v1009
    %v1015 = vmul.f32 1.0, %v1014
    %v1016 = vmul.f32 %v1015, 2.0
    %v1017 = vsub.f32 %v1016, 1.0
    %v1018 = vmul.f32 %v1015, %v863
    %1020 = vrot.lane.b32.xlu0 %v1017, 64
    %v1021 = vpop.permute.xlu0 %1020
    %v1023 = vmul.f32 %v1015, %v1021
    %1025 = vrot.lane.b32.xlu0 %v1023, 32
    %v1026 = vpop.permute.xlu0 %1025
    %v1028 = vadd.f32 %v1018, %v1026
    %v1029 = vtanh.pop %v1028
    %1031 = vrot.lane.b32.xlu0 %v1029, 64
    %v1032 = vpop.permute.xlu0 %1031
    %v1034 = vmul.f32 %v1015, %v1032
    %1036 = vrot.lane.b32.xlu0 %v1034, 32
    %v1037 = vpop.permute.xlu0 %1036
    %1039 = vst.msk [vmem:[#allocation2 + $0x5] sm:$0x1] %vm213, %v1037
    %s1040 = sld [smem:[#allocation3 + $0x6]]
    %v1041 = vld [vmem:[%s2] sm:$0xff]
    %v1042 = vld [vmem:[%s2 + $0x8] sm:$0xff]
    %v1043 = vld [vmem:[%s2 + $0x10] sm:$0xff]
    %v1044 = vld [vmem:[%s2 + $0x18] sm:$0xff]
    %1045 = vmatpush.msra.mxu0 0.0
    %1046 = vmatpush.msra.mxu0 0.0
    %1047 = vmatpush.msra.mxu0 0.0
    %1048 = vmatpush.msra.mxu0 0.0
    %1049 = vmatpush.msra.mxu0 0.0
    %1050 = vmatpush.msra.mxu0 0.0
    %1051 = vmatpush.msra.mxu0 0.0
    %1052 = vmatpush.msra.mxu0 0.0
    %1053 = vmatpush.msra.mxu0 0.0
    %1054 = vmatpush.msra.mxu0 0.0
    %1055 = vmatpush.msra.mxu0 0.0
    %1056 = vmatpush.msra.mxu0 0.0
    %1057 = vmatpush.msra.mxu0 %v1044
    %1058 = vmatpush.msra.mxu0 %v1043
    %1059 = vmatpush.msra.mxu0 %v1042
    %1060 = vmatpush.msra.mxu0 %v1041
    %1061 = vmatmul.f32.gmra.mxu0 %v975
    %v1062 = vpop.f32.mrf.mxu0
    %v1063 = vadd.f32 0.0, %v1062
    %1064 = vdwg.mxu0
    %v1065 = vld [vmem:[%s4] sm:$0xff]
    %v1066 = vld [vmem:[%s4 + $0x8] sm:$0xff]
    %v1067 = vld [vmem:[%s4 + $0x10] sm:$0xff]
    %v1068 = vld [vmem:[%s4 + $0x18] sm:$0xff]
    %v1069 = vld [vmem:[%s5] sm:$0x1]
    %v1070 = vsel %vm52, %v1037, 0
    %1072 = vmatpush.msra.mxu0 0.0
    %1073 = vmatpush.msra.mxu0 0.0
    %1074 = vmatpush.msra.mxu0 0.0
    %1075 = vmatpush.msra.mxu0 0.0
    %1076 = vmatpush.msra.mxu0 0.0
    %1077 = vmatpush.msra.mxu0 0.0
    %1078 = vmatpush.msra.mxu0 0.0
    %1079 = vmatpush.msra.mxu0 0.0
    %1080 = vmatpush.msra.mxu0 0.0
    %1081 = vmatpush.msra.mxu0 0.0
    %1082 = vmatpush.msra.mxu0 0.0
    %1083 = vmatpush.msra.mxu0 0.0
    %1084 = vmatpush.msra.mxu0 %v1068
    %1085 = vmatpush.msra.mxu0 %v1067
    %1086 = vmatpush.msra.mxu0 %v1066
    %1087 = vmatpush.msra.mxu0 %v1065
    %1088 = vmatmul.f32.gmra.mxu0 %v1070
    %v1089 = vpop.f32.mrf.mxu0
    %v1090 = vadd.f32 %v1069, %v1089
    %1091 = vdwg.mxu0
    %s1092 = scalar_lea.vmem %s1, %s1040
    %v1093 = vld [vmem:[%s1092] sm:$0x1]
    %v1094 = vadd.f32 %v1093, %v1063
    %v1095 = vxor.u32 %v1094, 2147483648
    %v1096 = vmul.f32 %v1095, 1.442695
    %v1097 = vpow.pop %v1096
    %v1098 = vadd.f32 %v1097, 1.0
    %v1099 = vrcp.pop %v1098
    %v1100 = vmul.f32 %v1098, %v1099
    %v1101 = vsub.f32 1.0, %v1100
    %v1102 = vmul.f32 %v1099, %v1101
    %v1103 = vadd.f32 %v1099, %v1102
    %vm1104 = vweird.f32 %v1098
    %vm1105 = vweird.f32 %v1099
    %vm1106 = vmor %vm1104, %vm1105
    %v1107 = vsel %vm1106, %v1099, %v1103
    %v1108 = vand.u32 2147483647, %v1098
    %vm1109 = vcmp.eq.f32.partialorder %v1108, 8.507059e+37
    %v1110 = vand.u32 %v1098, 2147483648
    %v1111 = vor.u32 1.1754944e-38, %v1110
    %v1112 = vsel %vm1109, %v1111, %v1107
    %v1113 = vmul.f32 1.0, %v1112
    %v1114 = vmul.f32 %v1113, 2.0
    %v1115 = vsub.f32 %v1114, 1.0
    %v1116 = vmul.f32 %v1113, %v961
    %1118 = vrot.lane.b32.xlu0 %v1115, 64
    %v1119 = vpop.permute.xlu0 %1118
    %v1121 = vmul.f32 %v1113, %v1119
    %1123 = vrot.lane.b32.xlu0 %v1121, 32
    %v1124 = vpop.permute.xlu0 %1123
    %v1126 = vadd.f32 %v1116, %v1124
    %v1127 = vtanh.pop %v1126
    %1129 = vrot.lane.b32.xlu0 %v1127, 64
    %v1130 = vpop.permute.xlu0 %1129
    %v1132 = vmul.f32 %v1113, %v1130
    %v1133 = vld [vmem:[%s3] sm:$0xff]
    %v1134 = vld [vmem:[%s3 + $0x8] sm:$0xff]
    %v1135 = vld [vmem:[%s3 + $0x10] sm:$0xff]
    %v1136 = vld [vmem:[%s3 + $0x18] sm:$0xff]
    %1138 = vrot.lane.b32.xlu0 %v1132, 32
    %v1139 = vpop.permute.xlu0 %1138
    %v1140 = vsel %vm52, %v1139, 0
    %1142 = vmatpush.msra.mxu0 0.0
    %1143 = vmatpush.msra.mxu0 0.0
    %1144 = vmatpush.msra.mxu0 0.0
    %1145 = vmatpush.msra.mxu0 0.0
    %1146 = vmatpush.msra.mxu0 0.0
    %1147 = vmatpush.msra.mxu0 0.0
    %1148 = vmatpush.msra.mxu0 0.0
    %1149 = vmatpush.msra.mxu0 0.0
    %1150 = vmatpush.msra.mxu0 0.0
    %1151 = vmatpush.msra.mxu0 0.0
    %1152 = vmatpush.msra.mxu0 0.0
    %1153 = vmatpush.msra.mxu0 0.0
    %1154 = vmatpush.msra.mxu0 %v1136
    %1155 = vmatpush.msra.mxu0 %v1135
    %1156 = vmatpush.msra.mxu0 %v1134
    %1157 = vmatpush.msra.mxu0 %v1133
    %1158 = vmatmul.f32.gmra.mxu0 %v1140
    %v1159 = vpop.f32.mrf.mxu0
    %v1160 = vadd.f32 %v1090, %v1159
    %1161 = vdwg.mxu0
    %v1162 = vxor.u32 %v1160, 2147483648
    %v1163 = vmul.f32 %v1162, 1.442695
    %v1164 = vpow.pop %v1163
    %v1165 = vadd.f32 %v1164, 1.0
    %v1166 = vrcp.pop %v1165
    %v1167 = vmul.f32 %v1165, %v1166
    %v1168 = vsub.f32 1.0, %v1167
    %v1169 = vmul.f32 %v1166, %v1168
    %v1170 = vadd.f32 %v1166, %v1169
    %vm1171 = vweird.f32 %v1165
    %vm1172 = vweird.f32 %v1166
    %vm1173 = vmor %vm1171, %vm1172
    %v1174 = vsel %vm1173, %v1166, %v1170
    %v1175 = vand.u32 2147483647, %v1165
    %vm1176 = vcmp.eq.f32.partialorder %v1175, 8.507059e+37
    %v1177 = vand.u32 %v1165, 2147483648
    %v1178 = vor.u32 1.1754944e-38, %v1177
    %v1179 = vsel %vm1176, %v1178, %v1174
    %v1180 = vmul.f32 1.0, %v1179
    %v1181 = vmul.f32 %v1180, 2.0
    %v1182 = vsub.f32 %v1181, 1.0
    %v1183 = vmul.f32 %v1180, %v1028
    %1185 = vrot.lane.b32.xlu0 %v1182, 64
    %v1186 = vpop.permute.xlu0 %1185
    %v1188 = vmul.f32 %v1180, %v1186
    %1190 = vrot.lane.b32.xlu0 %v1188, 32
    %v1191 = vpop.permute.xlu0 %1190
    %v1193 = vadd.f32 %v1183, %v1191
    %v1194 = vtanh.pop %v1193
    %1196 = vrot.lane.b32.xlu0 %v1194, 64
    %v1197 = vpop.permute.xlu0 %1196
    %v1199 = vmul.f32 %v1180, %v1197
    %1201 = vrot.lane.b32.xlu0 %v1199, 32
    %v1202 = vpop.permute.xlu0 %1201
    %1204 = vst.msk [vmem:[#allocation2 + $0x6] sm:$0x1] %vm213, %v1202
    %s1205 = sld [smem:[#allocation3 + $0x7]]
    %v1206 = vld [vmem:[%s2] sm:$0xff]
    %v1207 = vld [vmem:[%s2 + $0x8] sm:$0xff]
    %v1208 = vld [vmem:[%s2 + $0x10] sm:$0xff]
    %v1209 = vld [vmem:[%s2 + $0x18] sm:$0xff]
    %1210 = vmatpush.msra.mxu0 0.0
    %1211 = vmatpush.msra.mxu0 0.0
    %1212 = vmatpush.msra.mxu0 0.0
    %1213 = vmatpush.msra.mxu0 0.0
    %1214 = vmatpush.msra.mxu0 0.0
    %1215 = vmatpush.msra.mxu0 0.0
    %1216 = vmatpush.msra.mxu0 0.0
    %1217 = vmatpush.msra.mxu0 0.0
    %1218 = vmatpush.msra.mxu0 0.0
    %1219 = vmatpush.msra.mxu0 0.0
    %1220 = vmatpush.msra.mxu0 0.0
    %1221 = vmatpush.msra.mxu0 0.0
    %1222 = vmatpush.msra.mxu0 %v1209
    %1223 = vmatpush.msra.mxu0 %v1208
    %1224 = vmatpush.msra.mxu0 %v1207
    %1225 = vmatpush.msra.mxu0 %v1206
    %1226 = vmatmul.f32.gmra.mxu0 %v1140
    %v1227 = vpop.f32.mrf.mxu0
    %v1228 = vadd.f32 0.0, %v1227
    %1229 = vdwg.mxu0
    %v1230 = vld [vmem:[%s4] sm:$0xff]
    %v1231 = vld [vmem:[%s4 + $0x8] sm:$0xff]
    %v1232 = vld [vmem:[%s4 + $0x10] sm:$0xff]
    %v1233 = vld [vmem:[%s4 + $0x18] sm:$0xff]
    %v1234 = vld [vmem:[%s5] sm:$0x1]
    %v1235 = vsel %vm52, %v1202, 0
    %1237 = vmatpush.msra.mxu0 0.0
    %1238 = vmatpush.msra.mxu0 0.0
    %1239 = vmatpush.msra.mxu0 0.0
    %1240 = vmatpush.msra.mxu0 0.0
    %1241 = vmatpush.msra.mxu0 0.0
    %1242 = vmatpush.msra.mxu0 0.0
    %1243 = vmatpush.msra.mxu0 0.0
    %1244 = vmatpush.msra.mxu0 0.0
    %1245 = vmatpush.msra.mxu0 0.0
    %1246 = vmatpush.msra.mxu0 0.0
    %1247 = vmatpush.msra.mxu0 0.0
    %1248 = vmatpush.msra.mxu0 0.0
    %1249 = vmatpush.msra.mxu0 %v1233
    %1250 = vmatpush.msra.mxu0 %v1232
    %1251 = vmatpush.msra.mxu0 %v1231
    %1252 = vmatpush.msra.mxu0 %v1230
    %1253 = vmatmul.f32.gmra.mxu0 %v1235
    %v1254 = vpop.f32.mrf.mxu0
    %v1255 = vadd.f32 %v1234, %v1254
    %1256 = vdwg.mxu0
    %s1257 = scalar_lea.vmem %s1, %s1205
    %v1258 = vld [vmem:[%s1257] sm:$0x1]
    %v1259 = vadd.f32 %v1258, %v1228
    %v1260 = vxor.u32 %v1259, 2147483648
    %v1261 = vmul.f32 %v1260, 1.442695
    %v1262 = vpow.pop %v1261
    %v1263 = vadd.f32 %v1262, 1.0
    %v1264 = vrcp.pop %v1263
    %v1265 = vmul.f32 %v1263, %v1264
    %v1266 = vsub.f32 1.0, %v1265
    %v1267 = vmul.f32 %v1264, %v1266
    %v1268 = vadd.f32 %v1264, %v1267
    %vm1269 = vweird.f32 %v1263
    %vm1270 = vweird.f32 %v1264
    %vm1271 = vmor %vm1269, %vm1270
    %v1272 = vsel %vm1271, %v1264, %v1268
    %v1273 = vand.u32 2147483647, %v1263
    %vm1274 = vcmp.eq.f32.partialorder %v1273, 8.507059e+37
    %v1275 = vand.u32 %v1263, 2147483648
    %v1276 = vor.u32 1.1754944e-38, %v1275
    %v1277 = vsel %vm1274, %v1276, %v1272
    %v1278 = vmul.f32 1.0, %v1277
    %v1279 = vmul.f32 %v1278, 2.0
    %v1280 = vsub.f32 %v1279, 1.0
    %v1281 = vmul.f32 %v1278, %v1126
    %1283 = vrot.lane.b32.xlu0 %v1280, 64
    %v1284 = vpop.permute.xlu0 %1283
    %v1286 = vmul.f32 %v1278, %v1284
    %1288 = vrot.lane.b32.xlu0 %v1286, 32
    %v1289 = vpop.permute.xlu0 %1288
    %v1291 = vadd.f32 %v1281, %v1289
    %v1292 = vtanh.pop %v1291
    %1294 = vrot.lane.b32.xlu0 %v1292, 64
    %v1295 = vpop.permute.xlu0 %1294
    %v1297 = vmul.f32 %v1278, %v1295
    %v1298 = vld [vmem:[%s3] sm:$0xff]
    %v1299 = vld [vmem:[%s3 + $0x8] sm:$0xff]
    %v1300 = vld [vmem:[%s3 + $0x10] sm:$0xff]
    %v1301 = vld [vmem:[%s3 + $0x18] sm:$0xff]
    %1303 = vrot.lane.b32.xlu0 %v1297, 32
    %v1304 = vpop.permute.xlu0 %1303
    %v1305 = vsel %vm52, %v1304, 0
    %1307 = vmatpush.msra.mxu0 0.0
    %1308 = vmatpush.msra.mxu0 0.0
    %1309 = vmatpush.msra.mxu0 0.0
    %1310 = vmatpush.msra.mxu0 0.0
    %1311 = vmatpush.msra.mxu0 0.0
    %1312 = vmatpush.msra.mxu0 0.0
    %1313 = vmatpush.msra.mxu0 0.0
    %1314 = vmatpush.msra.mxu0 0.0
    %1315 = vmatpush.msra.mxu0 0.0
    %1316 = vmatpush.msra.mxu0 0.0
    %1317 = vmatpush.msra.mxu0 0.0
    %1318 = vmatpush.msra.mxu0 0.0
    %1319 = vmatpush.msra.mxu0 %v1301
    %1320 = vmatpush.msra.mxu0 %v1300
    %1321 = vmatpush.msra.mxu0 %v1299
    %1322 = vmatpush.msra.mxu0 %v1298
    %1323 = vmatmul.f32.gmra.mxu0 %v1305
    %v1324 = vpop.f32.mrf.mxu0
    %v1325 = vadd.f32 %v1255, %v1324
    %1326 = vdwg.mxu0
    %v1327 = vxor.u32 %v1325, 2147483648
    %v1328 = vmul.f32 %v1327, 1.442695
    %v1329 = vpow.pop %v1328
    %v1330 = vadd.f32 %v1329, 1.0
    %v1331 = vrcp.pop %v1330
    %v1332 = vmul.f32 %v1330, %v1331
    %v1333 = vsub.f32 1.0, %v1332
    %v1334 = vmul.f32 %v1331, %v1333
    %v1335 = vadd.f32 %v1331, %v1334
    %vm1336 = vweird.f32 %v1330
    %vm1337 = vweird.f32 %v1331
    %vm1338 = vmor %vm1336, %vm1337
    %v1339 = vsel %vm1338, %v1331, %v1335
    %v1340 = vand.u32 2147483647, %v1330
    %vm1341 = vcmp.eq.f32.partialorder %v1340, 8.507059e+37
    %v1342 = vand.u32 %v1330, 2147483648
    %v1343 = vor.u32 1.1754944e-38, %v1342
    %v1344 = vsel %vm1341, %v1343, %v1339
    %v1345 = vmul.f32 1.0, %v1344
    %v1346 = vmul.f32 %v1345, 2.0
    %v1347 = vsub.f32 %v1346, 1.0
    %v1348 = vmul.f32 %v1345, %v1193
    %1350 = vrot.lane.b32.xlu0 %v1347, 64
    %v1351 = vpop.permute.xlu0 %1350
    %v1353 = vmul.f32 %v1345, %v1351
    %1355 = vrot.lane.b32.xlu0 %v1353, 32
    %v1356 = vpop.permute.xlu0 %1355
    %v1358 = vadd.f32 %v1348, %v1356
    %v1359 = vtanh.pop %v1358
    %1361 = vrot.lane.b32.xlu0 %v1359, 64
    %v1362 = vpop.permute.xlu0 %1361
    %v1364 = vmul.f32 %v1345, %v1362
    %1366 = vrot.lane.b32.xlu0 %v1364, 32
    %v1367 = vpop.permute.xlu0 %1366
    %1369 = vst.msk [vmem:[#allocation2 + $0x7] sm:$0x1] %vm213, %v1367
    %v1370 = vld [vmem:[#allocation2] sm:$0xff]
    %v1371 = vld [vmem:[%s6] sm:$0xff]
    %v1372 = vld [vmem:[%s6 + $0x8] sm:$0xff]
    %v1373 = vld [vmem:[%s6 + $0x10] sm:$0xff]
    %v1374 = vld [vmem:[%s6 + $0x18] sm:$0xff]
    %v1375 = vld [vmem:[%s7] sm:$0x1]
    %v1377 = vperm.slane %v1375, 0
    %v1380 = vsel %vm52, %v1370, 0
    %1382 = vmatpush.msra.mxu0 0.0
    %1383 = vmatpush.msra.mxu0 0.0
    %1384 = vmatpush.msra.mxu0 0.0
    %1385 = vmatpush.msra.mxu0 0.0
    %1386 = vmatpush.msra.mxu0 0.0
    %1387 = vmatpush.msra.mxu0 0.0
    %1388 = vmatpush.msra.mxu0 0.0
    %1389 = vmatpush.msra.mxu0 0.0
    %1390 = vmatpush.msra.mxu0 0.0
    %1391 = vmatpush.msra.mxu0 0.0
    %1392 = vmatpush.msra.mxu0 0.0
    %1393 = vmatpush.msra.mxu0 0.0
    %1394 = vmatpush.msra.mxu0 %v1374
    %1395 = vmatpush.msra.mxu0 %v1373
    %1396 = vmatpush.msra.mxu0 %v1372
    %1397 = vmatpush.msra.mxu0 %v1371
    %1398 = vmatmul.f32.gmra.mxu0 %v1380
    %v1399 = vpop.f32.mrf.mxu0
    %v1400 = vadd.f32 %v1377, %v1399
    %1401 = vdwg.mxu0
    %1402 = vst [vmem:[#allocation6] sm:$0xff] %v1400
    %v1403 = vrot.slane %v1364, 7
    %vm1405 = vcmask 1040384
    %v1406 = vsel %vm1405, %v1297, %v1403
    %1408 = vrot.lane.b32.xlu0 %v1406, 32
    %v1409 = vpop.permute.xlu0 %1408
    %vm1411 = vcmask 254976
    %1412 = vst.msk [vmem:[#allocation7] sm:$0x3] %vm1411, %v1409
    %v1414 = vrot.slane %v1358, 7
    %v1416 = vsel %vm1405, %v1291, %v1414
    %1418 = vrot.lane.b32.xlu0 %v1416, 96
    %v1419 = vpop.permute.xlu0 %1418
    %1421 = vst.msk [vmem:[#allocation9] sm:$0x3] %vm1411, %v1419
    // Predicated region
    $region38: #{torch_lstm_forward.1} parent=1 // pred_check
      _
    $region39: #{torch_lstm_forward.1} parent=1 // pred_check_branch
      %1423 = sbr.rel (0) target = $region41
    $region40: #{torch_lstm_forward.1} parent=1 // pred_region
      %1425 = vsyncadd [#allocation4], 0
      %s1427 = sshll.u32 [#allocation6], 4
      %s1428 = int_to_ptr.vmem [resolvable:$true] %s1427
      %s1429 = sshll.u32 %s8, 4
      %s1430 = int_to_ptr.hbm [resolvable:$true] %s1429
      %1432 = dma.vmem_to_hbm [thread:$0]  %s1428, 128, %s1430, [#allocation4]
    $region41: #{torch_lstm_forward.1} parent=1 // pred_fallthru
      _
    // Predicated region
    $region42: #{torch_lstm_forward.1} parent=1 // pred_check
      _
    $region43: #{torch_lstm_forward.1} parent=1 // pred_check_branch
      %1434 = sbr.rel (0) target = $region45
    $region44: #{torch_lstm_forward.1} parent=1 // pred_region
      %1436 = vsyncadd [#allocation8], 0
      %s1438 = sshll.u32 [#allocation7], 4
      %s1439 = int_to_ptr.vmem [resolvable:$true] %s1438
      %s1440 = sshll.u32 %s9, 4
      %s1441 = int_to_ptr.hbm [resolvable:$true] %s1440
      %1443 = dma.vmem_to_hbm [thread:$0]  %s1439, 32, %s1441, [#allocation8]
    $region45: #{torch_lstm_forward.1} parent=1 // pred_fallthru
      _
    // Predicated region
    $region46: #{torch_lstm_forward.1} parent=1 // pred_check
      _
    $region47: #{torch_lstm_forward.1} parent=1 // pred_check_branch
      %1445 = sbr.rel (0) target = $region49
    $region48: #{torch_lstm_forward.1} parent=1 // pred_region
      %1447 = vsyncadd [#allocation8], 0
      %s1449 = sshll.u32 [#allocation9], 4
      %s1450 = int_to_ptr.vmem [resolvable:$true] %s1449
      %s1451 = sshll.u32 %s10, 4
      %s1452 = int_to_ptr.hbm [resolvable:$true] %s1451
      %1454 = dma.vmem_to_hbm [thread:$0]  %s1450, 32, %s1452, [#allocation8]
    $region49: #{torch_lstm_forward.1} parent=1 // pred_fallthru
      _
    // Predicated region
    $region50: #{torch_lstm_forward.1} parent=1 // pred_check
      _
    $region51: #{torch_lstm_forward.1} parent=1 // pred_check_branch
      %1456 = sbr.rel (0) target = $region53
    $region52: #{torch_lstm_forward.1} parent=1 // pred_region
      %1458 = dma.done [#allocation4], 128
    $region53: #{torch_lstm_forward.1} parent=1 // pred_fallthru
      _
    // Predicated region
    $region54: #{torch_lstm_forward.1} parent=1 // pred_check
      _
    $region55: #{torch_lstm_forward.1} parent=1 // pred_check_branch
      %1460 = sbr.rel (0) target = $region57
    $region56: #{torch_lstm_forward.1} parent=1 // pred_region
      %1462 = dma.done [#allocation8], 32
    $region57: #{torch_lstm_forward.1} parent=1 // pred_fallthru
      _
    // Predicated region
    $region58: #{torch_lstm_forward.1} parent=1 // pred_check
      _
    $region59: #{torch_lstm_forward.1} parent=1 // pred_check_branch
      %1464 = sbr.rel (0) target = $region61
    $region60: #{torch_lstm_forward.1} parent=1 // pred_region
      %1466 = dma.done [#allocation8], 32
    $region61: #{torch_lstm_forward.1} parent=1 // pred_fallthru
      _
    %1467 = vsyncpa [#allocation4], 1
    %1468 = vsyncpa [#allocation8], 1
    %1469 = vsyncpa [#allocation5], 1

</llo_original>
